<compile_context>
chip_gen: v7x
topology: tpu7x:2x2x1
jax: 0.10.0
libtpu: 0.0.40
codegen_flags: <defaults>
</compile_context>

<pallas_src>
import math

import numpy as np
import jax
import jax.numpy as jnp
from jax.experimental import pallas as pl
from jax.experimental.pallas import tpu as pltpu

BN_EPS = 1e-5
MXU_DTYPE = jnp.bfloat16  # matmul operand dtype; accumulation stays float32


def caculate_size(input_size, kernel_size, padding, stride):
    """Port of EDEN caculateSize."""
    return int((input_size + 2 * padding - kernel_size) / stride) + 1


# ----------------------------------------------------------------------------
# In-kernel building blocks
# ----------------------------------------------------------------------------
def _apply_act(y, act):
    if act is None or act == "linear":
        return y
    if act == "relu":
        return jnp.maximum(y, 0.0)
    if act == "leaky relu":
        return jnp.where(y > 0, y, 0.01 * y)
    if act == "sigmoid":
        return jax.nn.sigmoid(y)
    if act == "softmax":  # nn.LogSoftmax(dim=1)
        m = jnp.max(y, axis=1, keepdims=True)
        return y - m - jnp.log(jnp.sum(jnp.exp(y - m), axis=1, keepdims=True))
    # TODO(synk): nn.PReLU has a learnable parameter; not supported here.
    raise ValueError(f"unsupported activation: {act}")


def _mxu_dot(a, b):
    """MXU matmul: activation cast to bf16 (weights are already bf16), f32 acc."""
    return jnp.dot(a.astype(MXU_DTYPE), b, preferred_element_type=jnp.float32)


def _conv_bn_pool(xpad_ref, w_ref, p_ref, g_ref, b_ref, n, cfg):
    """One conv block on a lane-dense, H-padded VMEM ref.

    xpad_ref: (n, h_in + 2*pad, w_in*cin) float32, zero halo rows.
    w_ref:    (k, w_in*cin, wc*cout) bf16 block-Toeplitz weights (W-pad folded in,
              output columns packed into `s` column-parity blocks).
    p_ref:    (wc*cout, wc*cout) float32 0/1 "same channel" matrix (BN reduce+tile).
    g_ref/b_ref: (1, wc*cout) float32 BN gamma/beta tiled per channel.

    Returns (n*h_out, w_out*cout) float32 (post conv+BN+pool, pre-activation).
    NOTE: the Conv2d bias is intentionally omitted -- training-mode BatchNorm's
    mean subtraction cancels any per-channel constant exactly.
    """
    k, s = cfg["k"], cfg["s"]
    hp = cfg["h_out"]                  # rows per row-parity (= post-pool H)
    lanes_in = cfg["lanes_in"]

    # Row-parity partial outputs: s * k tiny MXU matmuls, each (n*hp, lanes_in).
    ys = []
    for p in range(s):
        acc = None
        for di in range(k):
            if s == 1:
                win = xpad_ref[:, di:di + hp, :]
            else:
                win = xpad_ref[:, pl.ds(p + di, hp, stride=s), :]
            lhs = win.reshape(n * hp, lanes_in)
            part = _mxu_dot(lhs, w_ref[di])
            acc = part if acc is None else acc + part
        ys.append(acc)                 # (n*hp, lanes_conv) f32

    # BatchNorm2d (training-mode batch stats, biased variance), centered 2-pass.
    m_tot = float(n * cfg["hc"] * cfg["wc"])
    s1 = ys[0].sum(axis=0, keepdims=True)
    for p in range(1, s):
        s1 = s1 + ys[p].sum(axis=0, keepdims=True)
    # channel-reduce + re-tile across lane groups in one small f32 matmul
    mean = jnp.dot(s1, p_ref[...], preferred_element_type=jnp.float32) * (1.0 / m_tot)
    s2 = None
    for p in range(s):
        d = ys[p] - mean
        c = jnp.sum(d * d, axis=0, keepdims=True)
        s2 = c if s2 is None else s2 + c
    var = jnp.dot(s2, p_ref[...], preferred_element_type=jnp.float32) * (1.0 / m_tot)
    scale = g_ref[...] * jax.lax.rsqrt(var + BN_EPS)
    shift = b_ref[...] - mean * scale

    # Normalize, then pool: H via max over row parities, W via max over the
    # column-parity lane blocks (both pure register ops -- no scratch).
    hmax = None
    for p in range(s):
        yn = ys[p] * scale + shift
        hmax = yn if hmax is None else jnp.maximum(hmax, yn)
    if s == 1:
        return hmax
    blk = cfg["lanes_out"]
    out = hmax[:, 0:blk]
    for q in range(1, s):
        out = jnp.maximum(out, hmax[:, q * blk:(q + 1) * blk])
    return out                          # (n*h_out, w_out*cout)


# ----------------------------------------------------------------------------
# Fused kernel builder (plan is static Python -> fully unrolled at trace time)
# ----------------------------------------------------------------------------
def _build_fused_kernel(n, conv_plan, fc_plan):
    n_conv, n_fc = len(conv_plan), len(fc_plan)

    def kernel(*refs):
        idx = 0
        x_ref = refs[idx]; idx += 1
        conv_refs = []
        for _ in range(n_conv):
            conv_refs.append(refs[idx:idx + 4]); idx += 4
        fc_refs = []
        for _ in range(n_fc):
            fc_refs.append(refs[idx:idx + 2]); idx += 2
        o_ref = refs[idx]; idx += 1
        scratch = list(refs[idx:])

        s_idx = 0
        cur_ref = x_ref           # layer 0 input is host-prepared (H-padded, lane-dense)
        act_val = None
        for i, cfg in enumerate(conv_plan):
            if i > 0:
                # Small H-padded staging scratch (zero only the halo rows; W-pad
                # is folded into the Toeplitz weight so no lane halo is needed).
                pad_ref = scratch[s_idx]; s_idx += 1
                p, h, L = cfg["pad"], cfg["h_in"], cfg["lanes_in"]
                if p > 0:
                    zrow = jnp.zeros((n, p, L), jnp.float32)
                    pad_ref[:, 0:p, :] = zrow
                    pad_ref[:, h + p:h + 2 * p, :] = zrow
                pad_ref[:, p:p + h, :] = act_val.reshape(n, h, L)
                cur_ref = pad_ref
            w_ref, p_ref, g_ref, b_ref = conv_refs[i]
            y = _conv_bn_pool(cur_ref, w_ref, p_ref, g_ref, b_ref, n, cfg)
            act_val = _apply_act(y, cfg["act"])          # PyTorch order: BN -> pool -> act

        # ---- flatten + FC stack ----
        # Stage the last conv activation once as a lane-dense (n, H*W*C) slab;
        # FC1's weight rows were pre-permuted at init so this slab directly
        # matches PyTorch's NCHW .view() flatten.  FC1 is then ONE matmul.
        last = conv_plan[-1]
        h_last, l_last = last["h_out"], last["lanes_out"]
        fc_in_ref = scratch[s_idx]; s_idx += 1
        a3 = act_val.reshape(n, h_last, l_last)
        for h in range(h_last):
            fc_in_ref[:, h * l_last:(h + 1) * l_last] = a3[:, h, :]
        y = fc_in_ref[...]                               # (n, H*W*C)
        for j in range(n_fc):
            w_ref, b_ref = fc_refs[j]
            y = _apply_act(_mxu_dot(y, w_ref[...]) + b_ref[...], fc_plan[j]["act"])
        o_ref[...] = y                                   # single small store at the end

    return kernel


# ----------------------------------------------------------------------------
# Host-side weight packing
# ----------------------------------------------------------------------------
def _build_toeplitz(knp, w_in, pad, s):
    """(cout,cin,k,k) conv kernel -> (k, w_in*cin, wc*cout) block-Toeplitz weights.

    W-padding is folded in (out-of-range taps are simply absent).  Output
    columns are packed into `s` column-parity blocks: block q holds output
    columns wo = s*g + q, so a kernel==stride max-pool is a max over blocks.
    """
    cout, cin, k, _ = knp.shape
    wo_n = caculate_size(w_in, k, pad, 1)
    assert wo_n == w_in and wo_n % s == 0
    ng = wo_n // s
    w = np.zeros((k, w_in * cin, wo_n * cout), np.float32)
    for di in range(k):
        for q in range(s):
            for g in range(ng):
                wo = s * g + q
                col0 = (q * ng + g) * cout
                for dj in range(k):
                    wj = wo + dj - pad
                    if 0 <= wj < w_in:
                        w[di, wj * cin:(wj + 1) * cin, col0:col0 + cout] = knp[:, :, di, dj].T
    return w


# ----------------------------------------------------------------------------
# AutoNet builder / forward
# ----------------------------------------------------------------------------
class AutoNetPallas:
    """Builds a fused-forward parameter plan from a chromosome (mirrors AutoNet.__init__)."""

    def __init__(self, pop_member, input_size, input_channel, key):
        self.net_member = pop_member[1]
        data_size = int(input_size)
        feature_map = int(input_channel)
        feature_map_after_conv = 0
        self.conv_plan, self.conv_params = [], []
        self.fc_plan, self.fc_params = [], []
        fc_nums = 0

        for layer in self.net_member:
            if layer[0] == 0:  # conv block: Conv2d + BatchNorm2d [+ MaxPool] [+ act]
                k = int(layer[4]); cout = int(layer[3]); pad = k // 2
                cin = feature_map
                h_in = w_in = data_size
                data_size = caculate_size(data_size, k, pad, 1)
                hc = wc = data_size
                assert hc == h_in and wc == w_in, "stride-1 same-pad conv expected"
                feature_map = cout
                feature_map_after_conv = cout
                s = 1
                if layer[2] is not None:
                    stride = int(layer[2])
                    pk = stride if data_size > stride else data_size
                    assert pk == stride, "only kernel == stride pooling implemented"
                    assert hc % stride == 0 and wc % stride == 0, "pool must tile evenly"
                    s = stride
                    data_size = caculate_size(data_size, pk, 0, stride)
                h_out = w_out = data_size
                # TODO(synk): training-mode nn.Dropout (stochastic) not implemented;
                # the chosen chromosome uses None dropouts.
                assert layer[1] is None

                bound = 1.0 / math.sqrt(cin * k * k)
                key, k1 = jax.random.split(key)
                knp = np.asarray(jax.random.uniform(k1, (cout, cin, k, k),
                                                    jnp.float32, -bound, bound))
                # Conv bias omitted: exactly cancelled by training-mode BatchNorm.
                w_toep = jnp.asarray(_build_toeplitz(knp, w_in, pad, s), jnp.bfloat16)
                lanes_conv = wc * cout
                lanes = np.arange(lanes_conv)
                p_mat = jnp.asarray(
                    (lanes[:, None] % cout == lanes[None, :] % cout).astype(np.float32))
                gamma_t = jnp.ones((1, lanes_conv), jnp.float32)   # BN gamma tiled per channel
                beta_t = jnp.zeros((1, lanes_conv), jnp.float32)   # BN beta tiled per channel

                self.conv_plan.append(dict(
                    cin=cin, cout=cout, k=k, pad=pad, s=s,
                    h_in=h_in, w_in=w_in, hc=hc, wc=wc, h_out=h_out, w_out=w_out,
                    lanes_in=w_in * cin, lanes_conv=lanes_conv,
                    lanes_out=w_out * cout, act=layer[-1]))
                self.conv_params.append((w_toep, p_mat, gamma_t, beta_t))
            else:  # fc layer (mid: layer[0]==1, output: layer[0]==2)
                fc_nums += 1
                if layer[0] == 1:
                    out_f = int(layer[2])
                    assert layer[1] is None  # TODO(synk): Dropout not implemented
                else:
                    out_f = int(layer[1])
                if fc_nums == 1:
                    c = int(feature_map_after_conv); hh = ww = int(data_size)
                    in_f = c * hh * ww
                else:
                    in_f = int(feature_map)
                bound = 1.0 / math.sqrt(in_f)
                key, k1, k2 = jax.random.split(key, 3)
                w = np.asarray(jax.random.uniform(k1, (in_f, out_f),
                                                  jnp.float32, -bound, bound))
                b = jax.random.uniform(k2, (1, out_f), jnp.float32, -bound, bound)
                if fc_nums == 1:
                    # Fold PyTorch's NCHW flatten into a row permutation of W1:
                    # our in-kernel slab index is h*(W*C) + w*C + c, PyTorch's is
                    # c*(H*W) + h*W + w.
                    hi, wi, ci = np.meshgrid(np.arange(hh), np.arange(ww), np.arange(c),
                                             indexing="ij")
                    perm = (ci * hh * ww + hi * ww + wi).reshape(-1)
                    w = w[perm, :]
                feature_map = out_f
                self.fc_plan.append(dict(act=layer[-1]))
                self.fc_params.append((jnp.asarray(w, jnp.bfloat16), b))

        self.num_classes = int(feature_map)
        assert self.conv_plan and self.fc_plan

    def __call__(self, x_nchw):
        n = int(x_nchw.shape[0])
        cfg0 = self.conv_plan[0]
        # NCHW -> lane-dense (n, H, W*C), H-padded for the first conv (tiny prep).
        x = jnp.transpose(x_nchw.astype(jnp.float32), (0, 2, 3, 1))
        x = x.reshape(n, cfg0["h_in"], cfg0["w_in"] * cfg0["cin"])
        if cfg0["pad"] > 0:
            x = jnp.pad(x, ((0, 0), (cfg0["pad"], cfg0["pad"]), (0, 0)))

        inputs = [x]
        for prm in self.conv_params:
            inputs.extend(prm)
        for prm in self.fc_params:
            inputs.extend(prm)

        scratch_shapes = []
        for i, cfg in enumerate(self.conv_plan):
            if i > 0:  # H-padded lane-dense staging buffer for this conv block
                scratch_shapes.append(pltpu.VMEM(
                    (n, cfg["h_in"] + 2 * cfg["pad"], cfg["lanes_in"]), jnp.float32))
        last = self.conv_plan[-1]
        scratch_shapes.append(pltpu.VMEM(                 # FC1 lane-dense input slab
            (n, last["h_out"] * last["lanes_out"]), jnp.float32))

        # Advisory cost estimate for XLA scheduling around the fused custom call.
        flops = 0
        for cfg in self.conv_plan:
            m = n * cfg["hc"] * cfg["wc"]
            flops += 2 * m * cfg["k"] * cfg["k"] * cfg["cin"] * cfg["cout"]
            flops += 10 * m * cfg["cout"]                       # BN + pool + act (rough)
            flops += 4 * cfg["lanes_conv"] ** 2                 # BN channel-reduce matmuls
        for (w, _b) in self.fc_params:
            flops += 2 * n * int(w.size)
        transcendentals = (2 * sum(cfg["lanes_conv"] for cfg in self.conv_plan)
                           + 2 * n * self.num_classes)
        bytes_accessed = int(sum(int(a.size) * a.dtype.itemsize for a in inputs)
                             + n * self.num_classes * 4)

        kernel = _build_fused_kernel(n, self.conv_plan, self.fc_plan)
        return pl.pallas_call(
            kernel,
            out_shape=jax.ShapeDtypeStruct((n, self.num_classes), jnp.float32),
            in_specs=[pl.BlockSpec(memory_space=pltpu.MemorySpace.VMEM)] * len(inputs),
            out_specs=pl.BlockSpec(memory_space=pltpu.MemorySpace.VMEM),
            scratch_shapes=scratch_shapes,
            cost_estimate=pl.CostEstimate(flops=int(flops),
                                          transcendentals=int(transcendentals),
                                          bytes_accessed=bytes_accessed),
        )(*inputs)


NET_MEMBER = [
    [0, None, 2, 8, 3, "relu"],      # conv 4->8 k3 pad1, BN, maxpool 2/2, relu
    [0, None, None, 16, 3, "relu"],  # conv 8->16 k3 pad1, BN, relu
    [1, None, 32, "relu"],           # fc 16*8*8 -> 32, relu
    [2, 10, "softmax"],              # fc 32 -> 10, LogSoftmax(dim=1)
]


if __name__ == "__main__":
    key = jax.random.PRNGKey(0)
    k_x, k_params = jax.random.split(key)

    N, C_IN, S = 2, 4, 16
    x = jax.random.normal(k_x, (N, C_IN, S, S), dtype=jnp.float32)  # NCHW, like PyTorch

    pop_member = [0, NET_MEMBER]  # AutoNet reads popMember[1]
    net = AutoNetPallas(pop_member, input_size=S, input_channel=C_IN, key=k_params)

    fwd = jax.jit(net.__call__)
    out = jax.block_until_ready(fwd(x))

    assert out.shape == (N, 10), out.shape
    assert bool(jnp.all(jnp.isfinite(out)))
    # LogSoftmax rows should sum to ~1 in probability space.
    assert bool(jnp.allclose(jnp.sum(jnp.exp(out), axis=1), 1.0, atol=1e-3))
    print("KERNEL_OK")
</pallas_src>

<mosaic_0001>
module attributes {stable_mosaic.version = 11 : i64} {
  func.func @kernel(%arg0: memref<2x18x64xf32, #tpu.memory_space<vmem>>, %arg1: memref<3x64x128xbf16, #tpu.memory_space<vmem>>, %arg2: memref<128x128xf32, #tpu.memory_space<vmem>>, %arg3: memref<1x128xf32, #tpu.memory_space<vmem>>, %arg4: memref<1x128xf32, #tpu.memory_space<vmem>>, %arg5: memref<3x64x128xbf16, #tpu.memory_space<vmem>>, %arg6: memref<128x128xf32, #tpu.memory_space<vmem>>, %arg7: memref<1x128xf32, #tpu.memory_space<vmem>>, %arg8: memref<1x128xf32, #tpu.memory_space<vmem>>, %arg9: memref<1024x32xbf16, #tpu.memory_space<vmem>>, %arg10: memref<1x32xf32, #tpu.memory_space<vmem>>, %arg11: memref<32x10xbf16, #tpu.memory_space<vmem>>, %arg12: memref<1x10xf32, #tpu.memory_space<vmem>>, %arg13: memref<2x10xf32, #tpu.memory_space<vmem>>, %arg14: memref<2x10x64xf32, #tpu.memory_space<vmem>>, %arg15: memref<2x1024xf32, #tpu.memory_space<vmem>>) attributes {dimension_semantics = [], scalar_prefetch = 0 : i64, scratch_operands = 2 : i64, tpu.core_type = #tpu.core_type<tc>} {
    %c0 = arith.constant 0 : index
    %c0_0 = arith.constant 0 : index
    %c0_1 = arith.constant 0 : index
    %0 = tpu.strided_load %arg0[%c0, %c0_0, %c0_1] {strides = array<i32: 1, 2, 1>} : memref<2x18x64xf32, #tpu.memory_space<vmem>>, vector<2x8x64xf32>
    %1 = vector.shape_cast %0 : vector<2x8x64xf32> to vector<16x64xf32>
    %c0_2 = arith.constant 0 : index
    %c0_3 = arith.constant 0 : index
    %c0_4 = arith.constant 0 : index
    %2 = vector.load %arg1[%c0_2, %c0_3, %c0_4] : memref<3x64x128xbf16, #tpu.memory_space<vmem>>, vector<1x64x128xbf16>
    %3 = vector.shape_cast %2 : vector<1x64x128xbf16> to vector<64x128xbf16>
    %4 = arith.truncf %1 : vector<16x64xf32> to vector<16x64xbf16>
    %cst = arith.constant dense<0.000000e+00> : vector<16x128xf32>
    %5 = tpu.matmul %4, %3, %cst {dimension_numbers = #tpu.dot_dimension_numbers<[1], [0], [0], [1], [0, 0, 1, 1], [], []>} : vector<16x64xbf16>, vector<64x128xbf16>, vector<16x128xf32> -> vector<16x128xf32>
    %c0_5 = arith.constant 0 : index
    %c1 = arith.constant 1 : index
    %c0_6 = arith.constant 0 : index
    %6 = tpu.strided_load %arg0[%c0_5, %c1, %c0_6] {strides = array<i32: 1, 2, 1>} : memref<2x18x64xf32, #tpu.memory_space<vmem>>, vector<2x8x64xf32>
    %7 = vector.shape_cast %6 : vector<2x8x64xf32> to vector<16x64xf32>
    %c1_7 = arith.constant 1 : index
    %c0_8 = arith.constant 0 : index
    %c0_9 = arith.constant 0 : index
    %8 = vector.load %arg1[%c1_7, %c0_8, %c0_9] : memref<3x64x128xbf16, #tpu.memory_space<vmem>>, vector<1x64x128xbf16>
    %9 = vector.shape_cast %8 : vector<1x64x128xbf16> to vector<64x128xbf16>
    %10 = arith.truncf %7 : vector<16x64xf32> to vector<16x64xbf16>
    %cst_10 = arith.constant dense<0.000000e+00> : vector<16x128xf32>
    %11 = tpu.matmul %10, %9, %cst_10 {dimension_numbers = #tpu.dot_dimension_numbers<[1], [0], [0], [1], [0, 0, 1, 1], [], []>} : vector<16x64xbf16>, vector<64x128xbf16>, vector<16x128xf32> -> vector<16x128xf32>
    %12 = arith.addf %5, %11 : vector<16x128xf32>
    %c0_11 = arith.constant 0 : index
    %c2 = arith.constant 2 : index
    %c0_12 = arith.constant 0 : index
    %13 = tpu.strided_load %arg0[%c0_11, %c2, %c0_12] {strides = array<i32: 1, 2, 1>} : memref<2x18x64xf32, #tpu.memory_space<vmem>>, vector<2x8x64xf32>
    %14 = vector.shape_cast %13 : vector<2x8x64xf32> to vector<16x64xf32>
    %c2_13 = arith.constant 2 : index
    %c0_14 = arith.constant 0 : index
    %c0_15 = arith.constant 0 : index
    %15 = vector.load %arg1[%c2_13, %c0_14, %c0_15] : memref<3x64x128xbf16, #tpu.memory_space<vmem>>, vector<1x64x128xbf16>
    %16 = vector.shape_cast %15 : vector<1x64x128xbf16> to vector<64x128xbf16>
    %17 = arith.truncf %14 : vector<16x64xf32> to vector<16x64xbf16>
    %cst_16 = arith.constant dense<0.000000e+00> : vector<16x128xf32>
    %18 = tpu.matmul %17, %16, %cst_16 {dimension_numbers = #tpu.dot_dimension_numbers<[1], [0], [0], [1], [0, 0, 1, 1], [], []>} : vector<16x64xbf16>, vector<64x128xbf16>, vector<16x128xf32> -> vector<16x128xf32>
    %19 = arith.addf %12, %18 : vector<16x128xf32>
    %c0_17 = arith.constant 0 : index
    %c1_18 = arith.constant 1 : index
    %c0_19 = arith.constant 0 : index
    %20 = tpu.strided_load %arg0[%c0_17, %c1_18, %c0_19] {strides = array<i32: 1, 2, 1>} : memref<2x18x64xf32, #tpu.memory_space<vmem>>, vector<2x8x64xf32>
    %21 = vector.shape_cast %20 : vector<2x8x64xf32> to vector<16x64xf32>
    %c0_20 = arith.constant 0 : index
    %c0_21 = arith.constant 0 : index
    %c0_22 = arith.constant 0 : index
    %22 = vector.load %arg1[%c0_20, %c0_21, %c0_22] : memref<3x64x128xbf16, #tpu.memory_space<vmem>>, vector<1x64x128xbf16>
    %23 = vector.shape_cast %22 : vector<1x64x128xbf16> to vector<64x128xbf16>
    %24 = arith.truncf %21 : vector<16x64xf32> to vector<16x64xbf16>
    %cst_23 = arith.constant dense<0.000000e+00> : vector<16x128xf32>
    %25 = tpu.matmul %24, %23, %cst_23 {dimension_numbers = #tpu.dot_dimension_numbers<[1], [0], [0], [1], [0, 0, 1, 1], [], []>} : vector<16x64xbf16>, vector<64x128xbf16>, vector<16x128xf32> -> vector<16x128xf32>
    %c0_24 = arith.constant 0 : index
    %c2_25 = arith.constant 2 : index
    %c0_26 = arith.constant 0 : index
    %26 = tpu.strided_load %arg0[%c0_24, %c2_25, %c0_26] {strides = array<i32: 1, 2, 1>} : memref<2x18x64xf32, #tpu.memory_space<vmem>>, vector<2x8x64xf32>
    %27 = vector.shape_cast %26 : vector<2x8x64xf32> to vector<16x64xf32>
    %c1_27 = arith.constant 1 : index
    %c0_28 = arith.constant 0 : index
    %c0_29 = arith.constant 0 : index
    %28 = vector.load %arg1[%c1_27, %c0_28, %c0_29] : memref<3x64x128xbf16, #tpu.memory_space<vmem>>, vector<1x64x128xbf16>
    %29 = vector.shape_cast %28 : vector<1x64x128xbf16> to vector<64x128xbf16>
    %30 = arith.truncf %27 : vector<16x64xf32> to vector<16x64xbf16>
    %cst_30 = arith.constant dense<0.000000e+00> : vector<16x128xf32>
    %31 = tpu.matmul %30, %29, %cst_30 {dimension_numbers = #tpu.dot_dimension_numbers<[1], [0], [0], [1], [0, 0, 1, 1], [], []>} : vector<16x64xbf16>, vector<64x128xbf16>, vector<16x128xf32> -> vector<16x128xf32>
    %32 = arith.addf %25, %31 : vector<16x128xf32>
    %c0_31 = arith.constant 0 : index
    %c3 = arith.constant 3 : index
    %c0_32 = arith.constant 0 : index
    %33 = tpu.strided_load %arg0[%c0_31, %c3, %c0_32] {strides = array<i32: 1, 2, 1>} : memref<2x18x64xf32, #tpu.memory_space<vmem>>, vector<2x8x64xf32>
    %34 = vector.shape_cast %33 : vector<2x8x64xf32> to vector<16x64xf32>
    %c2_33 = arith.constant 2 : index
    %c0_34 = arith.constant 0 : index
    %c0_35 = arith.constant 0 : index
    %35 = vector.load %arg1[%c2_33, %c0_34, %c0_35] : memref<3x64x128xbf16, #tpu.memory_space<vmem>>, vector<1x64x128xbf16>
    %36 = vector.shape_cast %35 : vector<1x64x128xbf16> to vector<64x128xbf16>
    %37 = arith.truncf %34 : vector<16x64xf32> to vector<16x64xbf16>
    %cst_36 = arith.constant dense<0.000000e+00> : vector<16x128xf32>
    %38 = tpu.matmul %37, %36, %cst_36 {dimension_numbers = #tpu.dot_dimension_numbers<[1], [0], [0], [1], [0, 0, 1, 1], [], []>} : vector<16x64xbf16>, vector<64x128xbf16>, vector<16x128xf32> -> vector<16x128xf32>
    %39 = arith.addf %32, %38 : vector<16x128xf32>
    %cst_37 = arith.constant dense<0.000000e+00> : vector<128xf32>
    %40 = vector.multi_reduction <add>, %19, %cst_37 [0] : vector<16x128xf32> to vector<128xf32>
    %41 = vector.shape_cast %40 : vector<128xf32> to vector<1x128xf32>
    %cst_38 = arith.constant dense<0.000000e+00> : vector<128xf32>
    %42 = vector.multi_reduction <add>, %39, %cst_38 [0] : vector<16x128xf32> to vector<128xf32>
    %43 = vector.shape_cast %42 : vector<128xf32> to vector<1x128xf32>
    %44 = arith.addf %41, %43 : vector<1x128xf32>
    %c0_39 = arith.constant 0 : index
    %c0_40 = arith.constant 0 : index
    %45 = vector.load %arg2[%c0_39, %c0_40] : memref<128x128xf32, #tpu.memory_space<vmem>>, vector<128x128xf32>
    %cst_41 = arith.constant dense<0.000000e+00> : vector<1x128xf32>
    %46 = tpu.matmul %44, %45, %cst_41 {dimension_numbers = #tpu.dot_dimension_numbers<[1], [0], [0], [1], [0, 0, 1, 1], [], []>} : vector<1x128xf32>, vector<128x128xf32>, vector<1x128xf32> -> vector<1x128xf32>
    %cst_42 = arith.constant 0.001953125 : f32
    %47 = vector.broadcast %cst_42 : f32 to vector<1x128xf32>
    %48 = arith.mulf %46, %47 : vector<1x128xf32>
    %49 = vector.broadcast %48 : vector<1x128xf32> to vector<16x128xf32>
    %50 = arith.subf %19, %49 : vector<16x128xf32>
    %51 = arith.mulf %50, %50 : vector<16x128xf32>
    %cst_43 = arith.constant dense<0.000000e+00> : vector<128xf32>
    %52 = vector.multi_reduction <add>, %51, %cst_43 [0] : vector<16x128xf32> to vector<128xf32>
    %53 = vector.shape_cast %52 : vector<128xf32> to vector<1x128xf32>
    %54 = vector.broadcast %48 : vector<1x128xf32> to vector<16x128xf32>
    %55 = arith.subf %39, %54 : vector<16x128xf32>
    %56 = arith.mulf %55, %55 : vector<16x128xf32>
    %cst_44 = arith.constant dense<0.000000e+00> : vector<128xf32>
    %57 = vector.multi_reduction <add>, %56, %cst_44 [0] : vector<16x128xf32> to vector<128xf32>
    %58 = vector.shape_cast %57 : vector<128xf32> to vector<1x128xf32>
    %59 = arith.addf %53, %58 : vector<1x128xf32>
    %c0_45 = arith.constant 0 : index
    %c0_46 = arith.constant 0 : index
    %60 = vector.load %arg2[%c0_45, %c0_46] : memref<128x128xf32, #tpu.memory_space<vmem>>, vector<128x128xf32>
    %cst_47 = arith.constant dense<0.000000e+00> : vector<1x128xf32>
    %61 = tpu.matmul %59, %60, %cst_47 {dimension_numbers = #tpu.dot_dimension_numbers<[1], [0], [0], [1], [0, 0, 1, 1], [], []>} : vector<1x128xf32>, vector<128x128xf32>, vector<1x128xf32> -> vector<1x128xf32>
    %cst_48 = arith.constant 0.001953125 : f32
    %62 = vector.broadcast %cst_48 : f32 to vector<1x128xf32>
    %63 = arith.mulf %61, %62 : vector<1x128xf32>
    %c0_49 = arith.constant 0 : index
    %c0_50 = arith.constant 0 : index
    %64 = vector.load %arg3[%c0_49, %c0_50] : memref<1x128xf32, #tpu.memory_space<vmem>>, vector<1x128xf32>
    %cst_51 = arith.constant 9.99999974E-6 : f32
    %65 = vector.broadcast %cst_51 : f32 to vector<1x128xf32>
    %66 = arith.addf %63, %65 : vector<1x128xf32>
    %67 = math.rsqrt %66 : vector<1x128xf32>
    %68 = arith.mulf %64, %67 : vector<1x128xf32>
    %c0_52 = arith.constant 0 : index
    %c0_53 = arith.constant 0 : index
    %69 = vector.load %arg4[%c0_52, %c0_53] : memref<1x128xf32, #tpu.memory_space<vmem>>, vector<1x128xf32>
    %70 = arith.mulf %48, %68 : vector<1x128xf32>
    %71 = arith.subf %69, %70 : vector<1x128xf32>
    %72 = vector.broadcast %68 : vector<1x128xf32> to vector<16x128xf32>
    %73 = arith.mulf %19, %72 : vector<16x128xf32>
    %74 = vector.broadcast %71 : vector<1x128xf32> to vector<16x128xf32>
    %75 = arith.addf %73, %74 : vector<16x128xf32>
    %76 = vector.broadcast %68 : vector<1x128xf32> to vector<16x128xf32>
    %77 = arith.mulf %39, %76 : vector<16x128xf32>
    %78 = vector.broadcast %71 : vector<1x128xf32> to vector<16x128xf32>
    %79 = arith.addf %77, %78 : vector<16x128xf32>
    %80 = arith.maximumf %75, %79 : vector<16x128xf32>
    %81 = vector.extract_strided_slice %80 {offsets = [0, 0], sizes = [16, 64], strides = [1, 1]} : vector<16x128xf32> to vector<16x64xf32>
    %82 = vector.extract_strided_slice %80 {offsets = [0, 64], sizes = [16, 64], strides = [1, 1]} : vector<16x128xf32> to vector<16x64xf32>
    %83 = arith.maximumf %81, %82 : vector<16x64xf32>
    %cst_54 = arith.constant 0.000000e+00 : f32
    %84 = vector.broadcast %cst_54 : f32 to vector<16x64xf32>
    %85 = arith.maximumf %83, %84 : vector<16x64xf32>
    %cst_55 = arith.constant 0.000000e+00 : f32
    %86 = vector.broadcast %cst_55 : f32 to vector<2x1x64xf32>
    %c0_56 = arith.constant 0 : index
    %c0_57 = arith.constant 0 : index
    %c0_58 = arith.constant 0 : index
    %87 = vector.load %arg14[%c0_56, %c0_57, %c0_58] : memref<2x10x64xf32, #tpu.memory_space<vmem>>, vector<2x1x64xf32>
    tpu.vector_store %arg14[%c0_56, %c0_57, %c0_58], %86 {strides = array<i32>} : memref<2x10x64xf32, #tpu.memory_space<vmem>>, vector<2x1x64xf32>,
    %c0_59 = arith.constant 0 : index
    %c9 = arith.constant 9 : index
    %c0_60 = arith.constant 0 : index
    %88 = vector.load %arg14[%c0_59, %c9, %c0_60] : memref<2x10x64xf32, #tpu.memory_space<vmem>>, vector<2x1x64xf32>
    tpu.vector_store %arg14[%c0_59, %c9, %c0_60], %86 {strides = array<i32>} : memref<2x10x64xf32, #tpu.memory_space<vmem>>, vector<2x1x64xf32>,
    %89 = vector.shape_cast %85 : vector<16x64xf32> to vector<2x8x64xf32>
    %c0_61 = arith.constant 0 : index
    %c1_62 = arith.constant 1 : index
    %c0_63 = arith.constant 0 : index
    %90 = vector.load %arg14[%c0_61, %c1_62, %c0_63] : memref<2x10x64xf32, #tpu.memory_space<vmem>>, vector<2x8x64xf32>
    tpu.vector_store %arg14[%c0_61, %c1_62, %c0_63], %89 {strides = array<i32>} : memref<2x10x64xf32, #tpu.memory_space<vmem>>, vector<2x8x64xf32>,
    %c0_64 = arith.constant 0 : index
    %c0_65 = arith.constant 0 : index
    %c0_66 = arith.constant 0 : index
    %91 = vector.load %arg14[%c0_64, %c0_65, %c0_66] : memref<2x10x64xf32, #tpu.memory_space<vmem>>, vector<2x8x64xf32>
    %92 = vector.shape_cast %91 : vector<2x8x64xf32> to vector<16x64xf32>
    %c0_67 = arith.constant 0 : index
    %c0_68 = arith.constant 0 : index
    %c0_69 = arith.constant 0 : index
    %93 = vector.load %arg5[%c0_67, %c0_68, %c0_69] : memref<3x64x128xbf16, #tpu.memory_space<vmem>>, vector<1x64x128xbf16>
    %94 = vector.shape_cast %93 : vector<1x64x128xbf16> to vector<64x128xbf16>
    %95 = arith.truncf %92 : vector<16x64xf32> to vector<16x64xbf16>
    %cst_70 = arith.constant dense<0.000000e+00> : vector<16x128xf32>
    %96 = tpu.matmul %95, %94, %cst_70 {dimension_numbers = #tpu.dot_dimension_numbers<[1], [0], [0], [1], [0, 0, 1, 1], [], []>} : vector<16x64xbf16>, vector<64x128xbf16>, vector<16x128xf32> -> vector<16x128xf32>
    %c0_71 = arith.constant 0 : index
    %c1_72 = arith.constant 1 : index
    %c0_73 = arith.constant 0 : index
    %97 = vector.load %arg14[%c0_71, %c1_72, %c0_73] : memref<2x10x64xf32, #tpu.memory_space<vmem>>, vector<2x8x64xf32>
    %98 = vector.shape_cast %97 : vector<2x8x64xf32> to vector<16x64xf32>
    %c1_74 = arith.constant 1 : index
    %c0_75 = arith.constant 0 : index
    %c0_76 = arith.constant 0 : index
    %99 = vector.load %arg5[%c1_74, %c0_75, %c0_76] : memref<3x64x128xbf16, #tpu.memory_space<vmem>>, vector<1x64x128xbf16>
    %100 = vector.shape_cast %99 : vector<1x64x128xbf16> to vector<64x128xbf16>
    %101 = arith.truncf %98 : vector<16x64xf32> to vector<16x64xbf16>
    %cst_77 = arith.constant dense<0.000000e+00> : vector<16x128xf32>
    %102 = tpu.matmul %101, %100, %cst_77 {dimension_numbers = #tpu.dot_dimension_numbers<[1], [0], [0], [1], [0, 0, 1, 1], [], []>} : vector<16x64xbf16>, vector<64x128xbf16>, vector<16x128xf32> -> vector<16x128xf32>
    %103 = arith.addf %96, %102 : vector<16x128xf32>
    %c0_78 = arith.constant 0 : index
    %c2_79 = arith.constant 2 : index
    %c0_80 = arith.constant 0 : index
    %104 = vector.load %arg14[%c0_78, %c2_79, %c0_80] : memref<2x10x64xf32, #tpu.memory_space<vmem>>, vector<2x8x64xf32>
    %105 = vector.shape_cast %104 : vector<2x8x64xf32> to vector<16x64xf32>
    %c2_81 = arith.constant 2 : index
    %c0_82 = arith.constant 0 : index
    %c0_83 = arith.constant 0 : index
    %106 = vector.load %arg5[%c2_81, %c0_82, %c0_83] : memref<3x64x128xbf16, #tpu.memory_space<vmem>>, vector<1x64x128xbf16>
    %107 = vector.shape_cast %106 : vector<1x64x128xbf16> to vector<64x128xbf16>
    %108 = arith.truncf %105 : vector<16x64xf32> to vector<16x64xbf16>
    %cst_84 = arith.constant dense<0.000000e+00> : vector<16x128xf32>
    %109 = tpu.matmul %108, %107, %cst_84 {dimension_numbers = #tpu.dot_dimension_numbers<[1], [0], [0], [1], [0, 0, 1, 1], [], []>} : vector<16x64xbf16>, vector<64x128xbf16>, vector<16x128xf32> -> vector<16x128xf32>
    %110 = arith.addf %103, %109 : vector<16x128xf32>
    %cst_85 = arith.constant dense<0.000000e+00> : vector<128xf32>
    %111 = vector.multi_reduction <add>, %110, %cst_85 [0] : vector<16x128xf32> to vector<128xf32>
    %112 = vector.shape_cast %111 : vector<128xf32> to vector<1x128xf32>
    %c0_86 = arith.constant 0 : index
    %c0_87 = arith.constant 0 : index
    %113 = vector.load %arg6[%c0_86, %c0_87] : memref<128x128xf32, #tpu.memory_space<vmem>>, vector<128x128xf32>
    %cst_88 = arith.constant dense<0.000000e+00> : vector<1x128xf32>
    %114 = tpu.matmul %112, %113, %cst_88 {dimension_numbers = #tpu.dot_dimension_numbers<[1], [0], [0], [1], [0, 0, 1, 1], [], []>} : vector<1x128xf32>, vector<128x128xf32>, vector<1x128xf32> -> vector<1x128xf32>
    %cst_89 = arith.constant 7.812500e-03 : f32
    %115 = vector.broadcast %cst_89 : f32 to vector<1x128xf32>
    %116 = arith.mulf %114, %115 : vector<1x128xf32>
    %117 = vector.broadcast %116 : vector<1x128xf32> to vector<16x128xf32>
    %118 = arith.subf %110, %117 : vector<16x128xf32>
    %119 = arith.mulf %118, %118 : vector<16x128xf32>
    %cst_90 = arith.constant dense<0.000000e+00> : vector<128xf32>
    %120 = vector.multi_reduction <add>, %119, %cst_90 [0] : vector<16x128xf32> to vector<128xf32>
    %121 = vector.shape_cast %120 : vector<128xf32> to vector<1x128xf32>
    %c0_91 = arith.constant 0 : index
    %c0_92 = arith.constant 0 : index
    %122 = vector.load %arg6[%c0_91, %c0_92] : memref<128x128xf32, #tpu.memory_space<vmem>>, vector<128x128xf32>
    %cst_93 = arith.constant dense<0.000000e+00> : vector<1x128xf32>
    %123 = tpu.matmul %121, %122, %cst_93 {dimension_numbers = #tpu.dot_dimension_numbers<[1], [0], [0], [1], [0, 0, 1, 1], [], []>} : vector<1x128xf32>, vector<128x128xf32>, vector<1x128xf32> -> vector<1x128xf32>
    %cst_94 = arith.constant 7.812500e-03 : f32
    %124 = vector.broadcast %cst_94 : f32 to vector<1x128xf32>
    %125 = arith.mulf %123, %124 : vector<1x128xf32>
    %c0_95 = arith.constant 0 : index
    %c0_96 = arith.constant 0 : index
    %126 = vector.load %arg7[%c0_95, %c0_96] : memref<1x128xf32, #tpu.memory_space<vmem>>, vector<1x128xf32>
    %cst_97 = arith.constant 9.99999974E-6 : f32
    %127 = vector.broadcast %cst_97 : f32 to vector<1x128xf32>
    %128 = arith.addf %125, %127 : vector<1x128xf32>
    %129 = math.rsqrt %128 : vector<1x128xf32>
    %130 = arith.mulf %126, %129 : vector<1x128xf32>
    %c0_98 = arith.constant 0 : index
    %c0_99 = arith.constant 0 : index
    %131 = vector.load %arg8[%c0_98, %c0_99] : memref<1x128xf32, #tpu.memory_space<vmem>>, vector<1x128xf32>
    %132 = arith.mulf %116, %130 : vector<1x128xf32>
    %133 = arith.subf %131, %132 : vector<1x128xf32>
    %134 = vector.broadcast %130 : vector<1x128xf32> to vector<16x128xf32>
    %135 = arith.mulf %110, %134 : vector<16x128xf32>
    %136 = vector.broadcast %133 : vector<1x128xf32> to vector<16x128xf32>
    %137 = arith.addf %135, %136 : vector<16x128xf32>
    %cst_100 = arith.constant 0.000000e+00 : f32
    %138 = vector.broadcast %cst_100 : f32 to vector<16x128xf32>
    %139 = arith.maximumf %137, %138 : vector<16x128xf32>
    %140 = vector.shape_cast %139 : vector<16x128xf32> to vector<2x8x128xf32>
    %141 = vector.extract_strided_slice %140 {offsets = [0, 0, 0], sizes = [2, 1, 128], strides = [1, 1, 1]} : vector<2x8x128xf32> to vector<2x1x128xf32>
    %142 = vector.shape_cast %141 : vector<2x1x128xf32> to vector<2x128xf32>
    %c0_101 = arith.constant 0 : index
    %c0_102 = arith.constant 0 : index
    %143 = vector.load %arg15[%c0_101, %c0_102] : memref<2x1024xf32, #tpu.memory_space<vmem>>, vector<2x128xf32>
    tpu.vector_store %arg15[%c0_101, %c0_102], %142 {strides = array<i32>} : memref<2x1024xf32, #tpu.memory_space<vmem>>, vector<2x128xf32>,
    %144 = vector.extract_strided_slice %140 {offsets = [0, 1, 0], sizes = [2, 1, 128], strides = [1, 1, 1]} : vector<2x8x128xf32> to vector<2x1x128xf32>
    %145 = vector.shape_cast %144 : vector<2x1x128xf32> to vector<2x128xf32>
    %c0_103 = arith.constant 0 : index
    %c128 = arith.constant 128 : index
    %146 = vector.load %arg15[%c0_103, %c128] : memref<2x1024xf32, #tpu.memory_space<vmem>>, vector<2x128xf32>
    tpu.vector_store %arg15[%c0_103, %c128], %145 {strides = array<i32>} : memref<2x1024xf32, #tpu.memory_space<vmem>>, vector<2x128xf32>,
    %147 = vector.extract_strided_slice %140 {offsets = [0, 2, 0], sizes = [2, 1, 128], strides = [1, 1, 1]} : vector<2x8x128xf32> to vector<2x1x128xf32>
    %148 = vector.shape_cast %147 : vector<2x1x128xf32> to vector<2x128xf32>
    %c0_104 = arith.constant 0 : index
    %c256 = arith.constant 256 : index
    %149 = vector.load %arg15[%c0_104, %c256] : memref<2x1024xf32, #tpu.memory_space<vmem>>, vector<2x128xf32>
    tpu.vector_store %arg15[%c0_104, %c256], %148 {strides = array<i32>} : memref<2x1024xf32, #tpu.memory_space<vmem>>, vector<2x128xf32>,
    %150 = vector.extract_strided_slice %140 {offsets = [0, 3, 0], sizes = [2, 1, 128], strides = [1, 1, 1]} : vector<2x8x128xf32> to vector<2x1x128xf32>
    %151 = vector.shape_cast %150 : vector<2x1x128xf32> to vector<2x128xf32>
    %c0_105 = arith.constant 0 : index
    %c384 = arith.constant 384 : index
    %152 = vector.load %arg15[%c0_105, %c384] : memref<2x1024xf32, #tpu.memory_space<vmem>>, vector<2x128xf32>
    tpu.vector_store %arg15[%c0_105, %c384], %151 {strides = array<i32>} : memref<2x1024xf32, #tpu.memory_space<vmem>>, vector<2x128xf32>,
    %153 = vector.extract_strided_slice %140 {offsets = [0, 4, 0], sizes = [2, 1, 128], strides = [1, 1, 1]} : vector<2x8x128xf32> to vector<2x1x128xf32>
    %154 = vector.shape_cast %153 : vector<2x1x128xf32> to vector<2x128xf32>
    %c0_106 = arith.constant 0 : index
    %c512 = arith.constant 512 : index
    %155 = vector.load %arg15[%c0_106, %c512] : memref<2x1024xf32, #tpu.memory_space<vmem>>, vector<2x128xf32>
    tpu.vector_store %arg15[%c0_106, %c512], %154 {strides = array<i32>} : memref<2x1024xf32, #tpu.memory_space<vmem>>, vector<2x128xf32>,
    %156 = vector.extract_strided_slice %140 {offsets = [0, 5, 0], sizes = [2, 1, 128], strides = [1, 1, 1]} : vector<2x8x128xf32> to vector<2x1x128xf32>
    %157 = vector.shape_cast %156 : vector<2x1x128xf32> to vector<2x128xf32>
    %c0_107 = arith.constant 0 : index
    %c640 = arith.constant 640 : index
    %158 = vector.load %arg15[%c0_107, %c640] : memref<2x1024xf32, #tpu.memory_space<vmem>>, vector<2x128xf32>
    tpu.vector_store %arg15[%c0_107, %c640], %157 {strides = array<i32>} : memref<2x1024xf32, #tpu.memory_space<vmem>>, vector<2x128xf32>,
    %159 = vector.extract_strided_slice %140 {offsets = [0, 6, 0], sizes = [2, 1, 128], strides = [1, 1, 1]} : vector<2x8x128xf32> to vector<2x1x128xf32>
    %160 = vector.shape_cast %159 : vector<2x1x128xf32> to vector<2x128xf32>
    %c0_108 = arith.constant 0 : index
    %c768 = arith.constant 768 : index
    %161 = vector.load %arg15[%c0_108, %c768] : memref<2x1024xf32, #tpu.memory_space<vmem>>, vector<2x128xf32>
    tpu.vector_store %arg15[%c0_108, %c768], %160 {strides = array<i32>} : memref<2x1024xf32, #tpu.memory_space<vmem>>, vector<2x128xf32>,
    %162 = vector.extract_strided_slice %140 {offsets = [0, 7, 0], sizes = [2, 1, 128], strides = [1, 1, 1]} : vector<2x8x128xf32> to vector<2x1x128xf32>
    %163 = vector.shape_cast %162 : vector<2x1x128xf32> to vector<2x128xf32>
    %c0_109 = arith.constant 0 : index
    %c896 = arith.constant 896 : index
    %164 = vector.load %arg15[%c0_109, %c896] : memref<2x1024xf32, #tpu.memory_space<vmem>>, vector<2x128xf32>
    tpu.vector_store %arg15[%c0_109, %c896], %163 {strides = array<i32>} : memref<2x1024xf32, #tpu.memory_space<vmem>>, vector<2x128xf32>,
    %c0_110 = arith.constant 0 : index
    %c0_111 = arith.constant 0 : index
    %165 = vector.load %arg15[%c0_110, %c0_111] : memref<2x1024xf32, #tpu.memory_space<vmem>>, vector<2x1024xf32>
    %c0_112 = arith.constant 0 : index
    %c0_113 = arith.constant 0 : index
    %166 = vector.load %arg9[%c0_112, %c0_113] : memref<1024x32xbf16, #tpu.memory_space<vmem>>, vector<1024x32xbf16>
    %167 = arith.truncf %165 : vector<2x1024xf32> to vector<2x1024xbf16>
    %cst_114 = arith.constant dense<0.000000e+00> : vector<2x32xf32>
    %168 = tpu.matmul %167, %166, %cst_114 {dimension_numbers = #tpu.dot_dimension_numbers<[1], [0], [0], [1], [0, 0, 1, 1], [], []>} : vector<2x1024xbf16>, vector<1024x32xbf16>, vector<2x32xf32> -> vector<2x32xf32>
    %c0_115 = arith.constant 0 : index
    %c0_116 = arith.constant 0 : index
    %169 = vector.load %arg10[%c0_115, %c0_116] : memref<1x32xf32, #tpu.memory_space<vmem>>, vector<1x32xf32>
    %170 = vector.broadcast %169 : vector<1x32xf32> to vector<2x32xf32>
    %171 = arith.addf %168, %170 : vector<2x32xf32>
    %cst_117 = arith.constant 0.000000e+00 : f32
    %172 = vector.broadcast %cst_117 : f32 to vector<2x32xf32>
    %173 = arith.maximumf %171, %172 : vector<2x32xf32>
    %c0_118 = arith.constant 0 : index
    %c0_119 = arith.constant 0 : index
    %174 = vector.load %arg11[%c0_118, %c0_119] : memref<32x10xbf16, #tpu.memory_space<vmem>>, vector<32x10xbf16>
    %175 = arith.truncf %173 : vector<2x32xf32> to vector<2x32xbf16>
    %cst_120 = arith.constant dense<0.000000e+00> : vector<2x10xf32>
    %176 = tpu.matmul %175, %174, %cst_120 {dimension_numbers = #tpu.dot_dimension_numbers<[1], [0], [0], [1], [0, 0, 1, 1], [], []>} : vector<2x32xbf16>, vector<32x10xbf16>, vector<2x10xf32> -> vector<2x10xf32>
    %c0_121 = arith.constant 0 : index
    %c0_122 = arith.constant 0 : index
    %177 = vector.load %arg12[%c0_121, %c0_122] : memref<1x10xf32, #tpu.memory_space<vmem>>, vector<1x10xf32>
    %178 = vector.broadcast %177 : vector<1x10xf32> to vector<2x10xf32>
    %179 = arith.addf %176, %178 : vector<2x10xf32>
    %cst_123 = arith.constant dense<0xFF800000> : vector<2xf32>
    %180 = vector.multi_reduction <maximumf>, %179, %cst_123 [1] : vector<2x10xf32> to vector<2xf32>
    %181 = vector.shape_cast %180 : vector<2xf32> to vector<2x1xf32>
    %182 = vector.broadcast %181 : vector<2x1xf32> to vector<2x10xf32>
    %183 = arith.subf %179, %182 : vector<2x10xf32>
    %184 = vector.broadcast %181 : vector<2x1xf32> to vector<2x10xf32>
    %185 = arith.subf %179, %184 : vector<2x10xf32>
    %186 = math.exp %185 : vector<2x10xf32>
    %cst_124 = arith.constant dense<0.000000e+00> : vector<2xf32>
    %187 = vector.multi_reduction <add>, %186, %cst_124 [1] : vector<2x10xf32> to vector<2xf32>
    %188 = vector.shape_cast %187 : vector<2xf32> to vector<2x1xf32>
    %189 = math.log %188 : vector<2x1xf32>
    %190 = vector.broadcast %189 : vector<2x1xf32> to vector<2x10xf32>
    %191 = arith.subf %183, %190 : vector<2x10xf32>
    %c0_125 = arith.constant 0 : index
    %c0_126 = arith.constant 0 : index
    %192 = vector.load %arg13[%c0_125, %c0_126] : memref<2x10xf32, #tpu.memory_space<vmem>>, vector<2x10xf32>
    tpu.vector_store %arg13[%c0_125, %c0_126], %191 {strides = array<i32>} : memref<2x10xf32, #tpu.memory_space<vmem>>, vector<2x10xf32>,
    return
  }
}

</mosaic_0001>

<llo_original>
// kernel: a_call__.1
$region0: #{a_call__.1}
  #allocation0 [shape = 'u32[]', space=smem, size = 0x4, offset = 0x4, fixed_abs, tag = 'smem constant byte address 0x4 - core index']
  #allocation1 [shape = 'u32[144,128]{1,0:T(1,128)}', space=vmem, size = 0x12000, scoped, tag = 'internal scratch']
  #allocation2 [shape = 'f32[2,10,64]{2,1,0:T(8,128)}', space=vmem, size = 0x4000, scoped, tag = 'scratch operand']
  #allocation3 [shape = 'f32[2,1024]{1,0:T(2,128)}', space=vmem, size = 0x2000, scoped, tag = 'scratch operand']
  %s0 = inlined_call_operand.vmem [shape: f32[2,18,64], index: 0, kind: input, shape index: {}]
  %s1 = inlined_call_operand.hbm [shape: bf16[3,64,128], index: 1, kind: input, shape index: {}]
  %s2 = inlined_call_operand.hbm [shape: f32[128,128], index: 2, kind: input, shape index: {}]
  %s3 = inlined_call_operand.vmem [shape: f32[1,128], index: 3, kind: input, shape index: {}, may-alias: {3,7}]
  %s4 = inlined_call_operand.vmem [shape: f32[1,128], index: 4, kind: input, shape index: {}, may-alias: {4,8}]
  %s5 = inlined_call_operand.hbm [shape: bf16[3,64,128], index: 5, kind: input, shape index: {}]
  %s6 = inlined_call_operand.hbm [shape: f32[128,128], index: 6, kind: input, shape index: {}]
  %s7 = inlined_call_operand.vmem [shape: f32[1,128], index: 7, kind: input, shape index: {}, may-alias: {3,7}]
  %s8 = inlined_call_operand.vmem [shape: f32[1,128], index: 8, kind: input, shape index: {}, may-alias: {4,8}]
  %s9 = inlined_call_operand.vmem [shape: bf16[1024,32], index: 9, kind: input, shape index: {}]
  %s10 = inlined_call_operand.vmem [shape: f32[1,32], index: 10, kind: input, shape index: {}]
  %s11 = inlined_call_operand.vmem [shape: bf16[32,10], index: 11, kind: input, shape index: {}]
  %s12 = inlined_call_operand.vmem [shape: f32[1,10], index: 12, kind: input, shape index: {}]
  %s13 = inlined_call_operand.hbm [shape: f32[2,10], index: 13, kind: output, shape index: {}]
  %s14 = sld [smem:[#allocation0]]
  $region78: #{a_call__.1} parent=0
    _
  %s16 = ssub.s32 1, %s14
  %s17 = scalar_select 0, %s16, %s14
  $region1: #{a_call__.1} parent=0
    #allocation4 [shape = 'u8[49152]{0}', space=vmem, size = 0xc000, scoped, tag = 'input window, operand 1, single buffered']
    #allocation5 [shape = 's32[1]{0}', space=sflag, size = 0x4, scoped, tag = 'scoped memory for a_call__.1']
    #allocation6 [shape = 's32[1]{0}', space=sflag, size = 0x4, scoped, tag = 'scoped memory for a_call__.1']
    #allocation7 [shape = 'u8[65536]{0}', space=vmem, size = 0x10000, scoped, tag = 'input window, operand 2, single buffered']
    #allocation8 [shape = 's32[1]{0}', space=sflag, size = 0x4, scoped, tag = 'scoped memory for a_call__.1']
    #allocation9 [shape = 'u8[49152]{0}', space=vmem, size = 0xc000, scoped, tag = 'input window, operand 5, single buffered']
    #allocation10 [shape = 'u8[65536]{0}', space=vmem, size = 0x10000, scoped, tag = 'input window, operand 6, single buffered']
    #allocation11 [shape = 's32[1]{0}', space=sflag, size = 0x4, scoped, tag = 'scoped memory for a_call__.1']
    #allocation12 [shape = 'u8[1024]{0}', space=vmem, size = 0x400, scoped, tag = 'output window, operand 0, single buffered']
    %18 = vsyncpa [#allocation5], 0
    %19 = vsyncpa [#allocation8], 0
    %20 = vsyncpa [#allocation11], 0
    %21 = vsyncpa [#allocation6], 0
    // Predicated region
    $region2: #{a_call__.1} parent=1 // pred_check
      _
    $region3: #{a_call__.1} parent=1 // pred_check_branch
      %23 = sbr.rel (0) target = $region5
    $region4: #{a_call__.1} parent=1 // pred_region
      _
    $region5: #{a_call__.1} parent=1 // pred_fallthru
      _
    // Predicated region
    $region6: #{a_call__.1} parent=1 // pred_check
      _
    $region7: #{a_call__.1} parent=1 // pred_check_branch
      %25 = sbr.rel (0) target = $region9
    $region8: #{a_call__.1} parent=1 // pred_region
      %s27 = ssub.s32 1536, 1536
      %28 = vsyncadd [#allocation5], %s27
      %s29 = sshll.u32 [#allocation4], 4
      %s30 = int_to_ptr.vmem [resolvable:$true] %s29
      %35 = dma.hbm_to_vmem [thread:$0]  %s1, 1536, %s30, [#allocation5], 64, 64, 4
    $region9: #{a_call__.1} parent=1 // pred_fallthru
      _
    // Predicated region
    $region10: #{a_call__.1} parent=1 // pred_check
      _
    $region11: #{a_call__.1} parent=1 // pred_check_branch
      %37 = sbr.rel (0) target = $region13
    $region12: #{a_call__.1} parent=1 // pred_region
      %s39 = ssub.s32 2048, 2048
      %40 = vsyncadd [#allocation8], %s39
      %s41 = sshll.u32 [#allocation7], 4
      %s42 = int_to_ptr.vmem [resolvable:$true] %s41
      %47 = dma.hbm_to_vmem [thread:$0]  %s2, 2048, %s42, [#allocation8], 128, 128, 8
    $region13: #{a_call__.1} parent=1 // pred_fallthru
      _
    // Predicated region
    $region14: #{a_call__.1} parent=1 // pred_check
      _
    $region15: #{a_call__.1} parent=1 // pred_check_branch
      %49 = sbr.rel (0) target = $region17
    $region16: #{a_call__.1} parent=1 // pred_region
      _
    $region17: #{a_call__.1} parent=1 // pred_fallthru
      _
    // Predicated region
    $region18: #{a_call__.1} parent=1 // pred_check
      _
    $region19: #{a_call__.1} parent=1 // pred_check_branch
      %51 = sbr.rel (0) target = $region21
    $region20: #{a_call__.1} parent=1 // pred_region
      _
    $region21: #{a_call__.1} parent=1 // pred_fallthru
      _
    // Predicated region
    $region22: #{a_call__.1} parent=1 // pred_check
      _
    $region23: #{a_call__.1} parent=1 // pred_check_branch
      %53 = sbr.rel (0) target = $region25
    $region24: #{a_call__.1} parent=1 // pred_region
      %s55 = ssub.s32 1536, 1536
      %56 = vsyncadd [#allocation8], %s55
      %s57 = sshll.u32 [#allocation9], 4
      %s58 = int_to_ptr.vmem [resolvable:$true] %s57
      %63 = dma.hbm_to_vmem [thread:$0]  %s5, 1536, %s58, [#allocation8], 64, 64, 4
    $region25: #{a_call__.1} parent=1 // pred_fallthru
      _
    // Predicated region
    $region26: #{a_call__.1} parent=1 // pred_check
      _
    $region27: #{a_call__.1} parent=1 // pred_check_branch
      %65 = sbr.rel (0) target = $region29
    $region28: #{a_call__.1} parent=1 // pred_region
      %s67 = ssub.s32 2048, 2048
      %68 = vsyncadd [#allocation11], %s67
      %s69 = sshll.u32 [#allocation10], 4
      %s70 = int_to_ptr.vmem [resolvable:$true] %s69
      %75 = dma.hbm_to_vmem [thread:$0]  %s6, 2048, %s70, [#allocation11], 128, 128, 8
    $region29: #{a_call__.1} parent=1 // pred_fallthru
      _
    // Predicated region
    $region30: #{a_call__.1} parent=1 // pred_check
      _
    $region31: #{a_call__.1} parent=1 // pred_check_branch
      %77 = sbr.rel (0) target = $region33
    $region32: #{a_call__.1} parent=1 // pred_region
      _
    $region33: #{a_call__.1} parent=1 // pred_fallthru
      _
    // Predicated region
    $region34: #{a_call__.1} parent=1 // pred_check
      _
    $region35: #{a_call__.1} parent=1 // pred_check_branch
      %79 = sbr.rel (0) target = $region37
    $region36: #{a_call__.1} parent=1 // pred_region
      _
    $region37: #{a_call__.1} parent=1 // pred_fallthru
      _
    // Predicated region
    $region38: #{a_call__.1} parent=1 // pred_check
      _
    $region39: #{a_call__.1} parent=1 // pred_check_branch
      %81 = sbr.rel (0) target = $region41
    $region40: #{a_call__.1} parent=1 // pred_region
      _
    $region41: #{a_call__.1} parent=1 // pred_fallthru
      _
    // Predicated region
    $region42: #{a_call__.1} parent=1 // pred_check
      _
    $region43: #{a_call__.1} parent=1 // pred_check_branch
      %83 = sbr.rel (0) target = $region45
    $region44: #{a_call__.1} parent=1 // pred_region
      _
    $region45: #{a_call__.1} parent=1 // pred_fallthru
      _
    // Predicated region
    $region46: #{a_call__.1} parent=1 // pred_check
      _
    $region47: #{a_call__.1} parent=1 // pred_check_branch
      %85 = sbr.rel (0) target = $region49
    $region48: #{a_call__.1} parent=1 // pred_region
      _
    $region49: #{a_call__.1} parent=1 // pred_fallthru
      _
    // Predicated region
    $region50: #{a_call__.1} parent=1 // pred_check
      _
    $region51: #{a_call__.1} parent=1 // pred_check_branch
      %87 = sbr.rel (0) target = $region53
    $region52: #{a_call__.1} parent=1 // pred_region
      _
    $region53: #{a_call__.1} parent=1 // pred_fallthru
      _
    // Predicated region
    $region54: #{a_call__.1} parent=1 // pred_check
      _
    $region55: #{a_call__.1} parent=1 // pred_check_branch
      %89 = sbr.rel (0) target = $region57
    $region56: #{a_call__.1} parent=1 // pred_region
      %90 = dma.done [#allocation5], 1536
    $region57: #{a_call__.1} parent=1 // pred_fallthru
      _
    // Predicated region
    $region58: #{a_call__.1} parent=1 // pred_check
      _
    $region59: #{a_call__.1} parent=1 // pred_check_branch
      %92 = sbr.rel (0) target = $region61
    $region60: #{a_call__.1} parent=1 // pred_region
      %93 = dma.done [#allocation8], 2048
    $region61: #{a_call__.1} parent=1 // pred_fallthru
      _
    // Predicated region
    $region62: #{a_call__.1} parent=1 // pred_check
      _
    $region63: #{a_call__.1} parent=1 // pred_check_branch
      %95 = sbr.rel (0) target = $region65
    $region64: #{a_call__.1} parent=1 // pred_region
      %96 = dma.done [#allocation8], 1536
    $region65: #{a_call__.1} parent=1 // pred_fallthru
      _
    // Predicated region
    $region66: #{a_call__.1} parent=1 // pred_check
      _
    $region67: #{a_call__.1} parent=1 // pred_check_branch
      %98 = sbr.rel (0) target = $region69
    $region68: #{a_call__.1} parent=1 // pred_region
      %99 = dma.done [#allocation11], 2048
    $region69: #{a_call__.1} parent=1 // pred_fallthru
      _
    %v101 = vld [vmem:[%s0] ss:$2 sm:$0xff]
    %s102 = scalar_lea.vmem %s0, 24
    %v103 = vld [vmem:[%s102] ss:$2 sm:$0xff]
    %v104 = vld [vmem:[#allocation4] sm:$0xf]
    %v105 = vld [vmem:[#allocation4 + $0x4] sm:$0xf]
    %v106 = vld [vmem:[#allocation4 + $0x8] sm:$0xf]
    %v107 = vld [vmem:[#allocation4 + $0xc] sm:$0xf]
    %v108 = vld [vmem:[#allocation4 + $0x10] sm:$0xf]
    %v109 = vld [vmem:[#allocation4 + $0x14] sm:$0xf]
    %v110 = vld [vmem:[#allocation4 + $0x18] sm:$0xf]
    %v111 = vld [vmem:[#allocation4 + $0x1c] sm:$0xf]
    %v112 = vpack.c.bf16 %v103, %v101
    %s113 = scalar_lea.vmem %s0, 1
    %v114 = vld [vmem:[%s113] ss:$2 sm:$0xff]
    %s115 = scalar_lea.vmem %s0, 25
    %v116 = vld [vmem:[%s115] ss:$2 sm:$0xff]
    %s117 = scalar_lea.vmem [#allocation4], 32
    %v118 = vld [vmem:[%s117] sm:$0xf]
    %v119 = vld [vmem:[%s117 + $0x4] sm:$0xf]
    %v120 = vld [vmem:[%s117 + $0x8] sm:$0xf]
    %v121 = vld [vmem:[%s117 + $0xc] sm:$0xf]
    %v122 = vld [vmem:[%s117 + $0x10] sm:$0xf]
    %v123 = vld [vmem:[%s117 + $0x14] sm:$0xf]
    %v124 = vld [vmem:[%s117 + $0x18] sm:$0xf]
    %v125 = vld [vmem:[%s117 + $0x1c] sm:$0xf]
    %v126 = vpack.c.bf16 %v116, %v114
    %v135 = vunpack.c.l.b16 %v118
    %v136 = vunpack.c.l.b16 %v119
    %v137 = vunpack.c.l.b16 %v120
    %v138 = vunpack.c.l.b16 %v121
    %v139 = vunpack.c.l.b16 %v122
    %v140 = vunpack.c.l.b16 %v123
    %v141 = vunpack.c.l.b16 %v124
    %v142 = vunpack.c.l.b16 %v125
    %v143 = vpack.c.b16 %v136, %v135
    %v144 = vpack.c.b16 %v138, %v137
    %v145 = vpack.c.b16 %v140, %v139
    %v146 = vpack.c.b16 %v142, %v141
    %vm151 = vcmask 523264
    %v153 = vsel %vm151, %v126, 0
    %155 = vmatprep.subr.bf16.mxu0 0
    %156 = vmatpush1.bf16.msra.mxu0 %v143
    %157 = vmatprep.subr.bf16.mxu0 0
    %158 = vmatpush1.bf16.msra.mxu0 %v144
    %159 = vmatprep.subr.bf16.mxu0 0
    %160 = vmatpush1.bf16.msra.mxu0 %v145
    %161 = vmatprep.subr.bf16.mxu0 0
    %162 = vmatpush1.bf16.msra.mxu0 %v146
    %163 = vmatprep.subr.bf16.mxu0 0
    %164 = vmatpush1.bf16.msra.mxu0 0
    %165 = vmatprep.subr.bf16.mxu0 0
    %166 = vmatpush1.bf16.msra.mxu0 0
    %167 = vmatprep.subr.bf16.mxu0 0
    %168 = vmatpush1.bf16.msra.mxu0 0
    %169 = vmatprep.subr.bf16.mxu0 0
    %170 = vmatpush1.bf16.msra.mxu0 0
    %171 = vmatprep.subr.bf16.mxu0 0
    %172 = vmatpush1.bf16.msra.mxu0 0
    %173 = vmatprep.subr.bf16.mxu0 0
    %174 = vmatpush1.bf16.msra.mxu0 0
    %175 = vmatprep.subr.bf16.mxu0 0
    %176 = vmatpush1.bf16.msra.mxu0 0
    %177 = vmatprep.subr.bf16.mxu0 0
    %178 = vmatpush1.bf16.msra.mxu0 0
    %179 = vmatprep.subr.bf16.mxu0 0
    %180 = vmatpush1.bf16.msra.mxu0 0
    %181 = vmatprep.subr.bf16.mxu0 0
    %182 = vmatpush1.bf16.msra.mxu0 0
    %183 = vmatprep.subr.bf16.mxu0 0
    %184 = vmatpush1.bf16.msra.mxu0 0
    %185 = vmatprep.subr.bf16.mxu0 0
    %186 = vmatpush1.bf16.msra.mxu0 0
    %187 = vmatprep.mubr.bf16.mxu0 0
    %188 = vmatmul.mubr.bf16.gmra.mrb[0].mxu0 %v153
    %v189 = vpop.f32.mrb[0].mxu0
    %v190 = vadd.f32 0.0, %v189
    %v191 = vpop.f32.mrb[0].mxu0
    %v192 = vpop.f32.mrb[0].mxu0
    %v193 = vadd.f32 0.0, %v192
    %v194 = vpop.f32.mrb[0].mxu0
    %195 = vdwg.mxu0
    %v204 = vunpack.c.l.b16 %v104
    %v205 = vunpack.c.l.b16 %v105
    %v206 = vunpack.c.l.b16 %v106
    %v207 = vunpack.c.l.b16 %v107
    %v208 = vunpack.c.l.b16 %v108
    %v209 = vunpack.c.l.b16 %v109
    %v210 = vunpack.c.l.b16 %v110
    %v211 = vunpack.c.l.b16 %v111
    %v212 = vpack.c.b16 %v205, %v204
    %v213 = vpack.c.b16 %v207, %v206
    %v214 = vpack.c.b16 %v209, %v208
    %v215 = vpack.c.b16 %v211, %v210
    %v221 = vsel %vm151, %v112, 0
    %223 = vmatprep.subr.bf16.mxu0 0
    %224 = vmatpush1.bf16.msra.mxu0 %v212
    %225 = vmatprep.subr.bf16.mxu0 0
    %226 = vmatpush1.bf16.msra.mxu0 %v213
    %227 = vmatprep.subr.bf16.mxu0 0
    %228 = vmatpush1.bf16.msra.mxu0 %v214
    %229 = vmatprep.subr.bf16.mxu0 0
    %230 = vmatpush1.bf16.msra.mxu0 %v215
    %231 = vmatprep.subr.bf16.mxu0 0
    %232 = vmatpush1.bf16.msra.mxu0 0
    %233 = vmatprep.subr.bf16.mxu0 0
    %234 = vmatpush1.bf16.msra.mxu0 0
    %235 = vmatprep.subr.bf16.mxu0 0
    %236 = vmatpush1.bf16.msra.mxu0 0
    %237 = vmatprep.subr.bf16.mxu0 0
    %238 = vmatpush1.bf16.msra.mxu0 0
    %239 = vmatprep.subr.bf16.mxu0 0
    %240 = vmatpush1.bf16.msra.mxu0 0
    %241 = vmatprep.subr.bf16.mxu0 0
    %242 = vmatpush1.bf16.msra.mxu0 0
    %243 = vmatprep.subr.bf16.mxu0 0
    %244 = vmatpush1.bf16.msra.mxu0 0
    %245 = vmatprep.subr.bf16.mxu0 0
    %246 = vmatpush1.bf16.msra.mxu0 0
    %247 = vmatprep.subr.bf16.mxu0 0
    %248 = vmatpush1.bf16.msra.mxu0 0
    %249 = vmatprep.subr.bf16.mxu0 0
    %250 = vmatpush1.bf16.msra.mxu0 0
    %251 = vmatprep.subr.bf16.mxu0 0
    %252 = vmatpush1.bf16.msra.mxu0 0
    %253 = vmatprep.subr.bf16.mxu0 0
    %254 = vmatpush1.bf16.msra.mxu0 0
    %255 = vmatprep.mubr.bf16.mxu0 0
    %256 = vmatmul.mubr.bf16.gmra.mrb[0].mxu0 %v221
    %v257 = vpop.f32.mrb[0].mxu0
    %v258 = vadd.f32 %v190, %v257
    %v259 = vpop.f32.mrb[0].mxu0
    %v260 = vpop.f32.mrb[0].mxu0
    %v261 = vadd.f32 %v193, %v260
    %v262 = vpop.f32.mrb[0].mxu0
    %263 = vdwg.mxu0
    %s264 = scalar_lea.vmem %s0, 2
    %v265 = vld [vmem:[%s264] ss:$2 sm:$0xff]
    %s266 = scalar_lea.vmem %s0, 26
    %v267 = vld [vmem:[%s266] ss:$2 sm:$0xff]
    %s268 = scalar_lea.vmem [#allocation4], 64
    %v269 = vld [vmem:[%s268] sm:$0xf]
    %v270 = vld [vmem:[%s268 + $0x4] sm:$0xf]
    %v271 = vld [vmem:[%s268 + $0x8] sm:$0xf]
    %v272 = vld [vmem:[%s268 + $0xc] sm:$0xf]
    %v273 = vld [vmem:[%s268 + $0x10] sm:$0xf]
    %v274 = vld [vmem:[%s268 + $0x14] sm:$0xf]
    %v275 = vld [vmem:[%s268 + $0x18] sm:$0xf]
    %v276 = vld [vmem:[%s268 + $0x1c] sm:$0xf]
    %v277 = vpack.c.bf16 %v267, %v265
    %v286 = vunpack.c.l.b16 %v269
    %v287 = vunpack.c.l.b16 %v270
    %v288 = vunpack.c.l.b16 %v271
    %v289 = vunpack.c.l.b16 %v272
    %v290 = vunpack.c.l.b16 %v273
    %v291 = vunpack.c.l.b16 %v274
    %v292 = vunpack.c.l.b16 %v275
    %v293 = vunpack.c.l.b16 %v276
    %v294 = vpack.c.b16 %v287, %v286
    %v295 = vpack.c.b16 %v289, %v288
    %v296 = vpack.c.b16 %v291, %v290
    %v297 = vpack.c.b16 %v293, %v292
    %v303 = vsel %vm151, %v277, 0
    %305 = vmatprep.subr.bf16.mxu0 0
    %306 = vmatpush1.bf16.msra.mxu0 %v294
    %307 = vmatprep.subr.bf16.mxu0 0
    %308 = vmatpush1.bf16.msra.mxu0 %v295
    %309 = vmatprep.subr.bf16.mxu0 0
    %310 = vmatpush1.bf16.msra.mxu0 %v296
    %311 = vmatprep.subr.bf16.mxu0 0
    %312 = vmatpush1.bf16.msra.mxu0 %v297
    %313 = vmatprep.subr.bf16.mxu0 0
    %314 = vmatpush1.bf16.msra.mxu0 0
    %315 = vmatprep.subr.bf16.mxu0 0
    %316 = vmatpush1.bf16.msra.mxu0 0
    %317 = vmatprep.subr.bf16.mxu0 0
    %318 = vmatpush1.bf16.msra.mxu0 0
    %319 = vmatprep.subr.bf16.mxu0 0
    %320 = vmatpush1.bf16.msra.mxu0 0
    %321 = vmatprep.subr.bf16.mxu0 0
    %322 = vmatpush1.bf16.msra.mxu0 0
    %323 = vmatprep.subr.bf16.mxu0 0
    %324 = vmatpush1.bf16.msra.mxu0 0
    %325 = vmatprep.subr.bf16.mxu0 0
    %326 = vmatpush1.bf16.msra.mxu0 0
    %327 = vmatprep.subr.bf16.mxu0 0
    %328 = vmatpush1.bf16.msra.mxu0 0
    %329 = vmatprep.subr.bf16.mxu0 0
    %330 = vmatpush1.bf16.msra.mxu0 0
    %331 = vmatprep.subr.bf16.mxu0 0
    %332 = vmatpush1.bf16.msra.mxu0 0
    %333 = vmatprep.subr.bf16.mxu0 0
    %334 = vmatpush1.bf16.msra.mxu0 0
    %335 = vmatprep.subr.bf16.mxu0 0
    %336 = vmatpush1.bf16.msra.mxu0 0
    %337 = vmatprep.mubr.bf16.mxu0 0
    %338 = vmatmul.mubr.bf16.gmra.mrb[0].mxu0 %v303
    %v339 = vpop.f32.mrb[0].mxu0
    %v340 = vadd.f32 0.0, %v339
    %v341 = vpop.f32.mrb[0].mxu0
    %v342 = vpop.f32.mrb[0].mxu0
    %v343 = vadd.f32 0.0, %v342
    %v344 = vpop.f32.mrb[0].mxu0
    %345 = vdwg.mxu0
    %v346 = vadd.f32 %v258, %v340
    %v347 = vadd.f32 %v261, %v343
    %348 = vmatprep.subr.bf16.mxu0 0
    %349 = vmatpush1.bf16.msra.mxu0 %v143
    %350 = vmatprep.subr.bf16.mxu0 0
    %351 = vmatpush1.bf16.msra.mxu0 %v144
    %352 = vmatprep.subr.bf16.mxu0 0
    %353 = vmatpush1.bf16.msra.mxu0 %v145
    %354 = vmatprep.subr.bf16.mxu0 0
    %355 = vmatpush1.bf16.msra.mxu0 %v146
    %356 = vmatprep.subr.bf16.mxu0 0
    %357 = vmatpush1.bf16.msra.mxu0 0
    %358 = vmatprep.subr.bf16.mxu0 0
    %359 = vmatpush1.bf16.msra.mxu0 0
    %360 = vmatprep.subr.bf16.mxu0 0
    %361 = vmatpush1.bf16.msra.mxu0 0
    %362 = vmatprep.subr.bf16.mxu0 0
    %363 = vmatpush1.bf16.msra.mxu0 0
    %364 = vmatprep.subr.bf16.mxu0 0
    %365 = vmatpush1.bf16.msra.mxu0 0
    %366 = vmatprep.subr.bf16.mxu0 0
    %367 = vmatpush1.bf16.msra.mxu0 0
    %368 = vmatprep.subr.bf16.mxu0 0
    %369 = vmatpush1.bf16.msra.mxu0 0
    %370 = vmatprep.subr.bf16.mxu0 0
    %371 = vmatpush1.bf16.msra.mxu0 0
    %372 = vmatprep.subr.bf16.mxu0 0
    %373 = vmatpush1.bf16.msra.mxu0 0
    %374 = vmatprep.subr.bf16.mxu0 0
    %375 = vmatpush1.bf16.msra.mxu0 0
    %376 = vmatprep.subr.bf16.mxu0 0
    %377 = vmatpush1.bf16.msra.mxu0 0
    %378 = vmatprep.subr.bf16.mxu0 0
    %379 = vmatpush1.bf16.msra.mxu0 0
    %380 = vmatprep.mubr.bf16.mxu0 0
    %381 = vmatmul.mubr.bf16.gmra.mrb[0].mxu0 %v303
    %v382 = vpop.f32.mrb[0].mxu0
    %v383 = vadd.f32 0.0, %v382
    %v384 = vpop.f32.mrb[0].mxu0
    %v385 = vpop.f32.mrb[0].mxu0
    %v386 = vadd.f32 0.0, %v385
    %v387 = vpop.f32.mrb[0].mxu0
    %388 = vdwg.mxu0
    %389 = vmatprep.subr.bf16.mxu0 0
    %390 = vmatpush1.bf16.msra.mxu0 %v212
    %391 = vmatprep.subr.bf16.mxu0 0
    %392 = vmatpush1.bf16.msra.mxu0 %v213
    %393 = vmatprep.subr.bf16.mxu0 0
    %394 = vmatpush1.bf16.msra.mxu0 %v214
    %395 = vmatprep.subr.bf16.mxu0 0
    %396 = vmatpush1.bf16.msra.mxu0 %v215
    %397 = vmatprep.subr.bf16.mxu0 0
    %398 = vmatpush1.bf16.msra.mxu0 0
    %399 = vmatprep.subr.bf16.mxu0 0
    %400 = vmatpush1.bf16.msra.mxu0 0
    %401 = vmatprep.subr.bf16.mxu0 0
    %402 = vmatpush1.bf16.msra.mxu0 0
    %403 = vmatprep.subr.bf16.mxu0 0
    %404 = vmatpush1.bf16.msra.mxu0 0
    %405 = vmatprep.subr.bf16.mxu0 0
    %406 = vmatpush1.bf16.msra.mxu0 0
    %407 = vmatprep.subr.bf16.mxu0 0
    %408 = vmatpush1.bf16.msra.mxu0 0
    %409 = vmatprep.subr.bf16.mxu0 0
    %410 = vmatpush1.bf16.msra.mxu0 0
    %411 = vmatprep.subr.bf16.mxu0 0
    %412 = vmatpush1.bf16.msra.mxu0 0
    %413 = vmatprep.subr.bf16.mxu0 0
    %414 = vmatpush1.bf16.msra.mxu0 0
    %415 = vmatprep.subr.bf16.mxu0 0
    %416 = vmatpush1.bf16.msra.mxu0 0
    %417 = vmatprep.subr.bf16.mxu0 0
    %418 = vmatpush1.bf16.msra.mxu0 0
    %419 = vmatprep.subr.bf16.mxu0 0
    %420 = vmatpush1.bf16.msra.mxu0 0
    %421 = vmatprep.mubr.bf16.mxu0 0
    %422 = vmatmul.mubr.bf16.gmra.mrb[0].mxu0 %v153
    %v423 = vpop.f32.mrb[0].mxu0
    %v424 = vadd.f32 %v383, %v423
    %v425 = vpop.f32.mrb[0].mxu0
    %v426 = vpop.f32.mrb[0].mxu0
    %v427 = vadd.f32 %v386, %v426
    %v428 = vpop.f32.mrb[0].mxu0
    %429 = vdwg.mxu0
    %s430 = scalar_lea.vmem %s0, 3
    %v431 = vld [vmem:[%s430] ss:$2 sm:$0xff]
    %s432 = scalar_lea.vmem %s0, 27
    %v433 = vld [vmem:[%s432] ss:$2 sm:$0xff]
    %v434 = vpack.c.bf16 %v433, %v431
    %v436 = vsel %vm151, %v434, 0
    %438 = vmatprep.subr.bf16.mxu0 0
    %439 = vmatpush1.bf16.msra.mxu0 %v294
    %440 = vmatprep.subr.bf16.mxu0 0
    %441 = vmatpush1.bf16.msra.mxu0 %v295
    %442 = vmatprep.subr.bf16.mxu0 0
    %443 = vmatpush1.bf16.msra.mxu0 %v296
    %444 = vmatprep.subr.bf16.mxu0 0
    %445 = vmatpush1.bf16.msra.mxu0 %v297
    %446 = vmatprep.subr.bf16.mxu0 0
    %447 = vmatpush1.bf16.msra.mxu0 0
    %448 = vmatprep.subr.bf16.mxu0 0
    %449 = vmatpush1.bf16.msra.mxu0 0
    %450 = vmatprep.subr.bf16.mxu0 0
    %451 = vmatpush1.bf16.msra.mxu0 0
    %452 = vmatprep.subr.bf16.mxu0 0
    %453 = vmatpush1.bf16.msra.mxu0 0
    %454 = vmatprep.subr.bf16.mxu0 0
    %455 = vmatpush1.bf16.msra.mxu0 0
    %456 = vmatprep.subr.bf16.mxu0 0
    %457 = vmatpush1.bf16.msra.mxu0 0
    %458 = vmatprep.subr.bf16.mxu0 0
    %459 = vmatpush1.bf16.msra.mxu0 0
    %460 = vmatprep.subr.bf16.mxu0 0
    %461 = vmatpush1.bf16.msra.mxu0 0
    %462 = vmatprep.subr.bf16.mxu0 0
    %463 = vmatpush1.bf16.msra.mxu0 0
    %464 = vmatprep.subr.bf16.mxu0 0
    %465 = vmatpush1.bf16.msra.mxu0 0
    %466 = vmatprep.subr.bf16.mxu0 0
    %467 = vmatpush1.bf16.msra.mxu0 0
    %468 = vmatprep.subr.bf16.mxu0 0
    %469 = vmatpush1.bf16.msra.mxu0 0
    %470 = vmatprep.mubr.bf16.mxu0 0
    %471 = vmatmul.mubr.bf16.gmra.mrb[0].mxu0 %v436
    %v472 = vpop.f32.mrb[0].mxu0
    %v473 = vadd.f32 0.0, %v472
    %v474 = vpop.f32.mrb[0].mxu0
    %v475 = vpop.f32.mrb[0].mxu0
    %v476 = vadd.f32 0.0, %v475
    %v477 = vpop.f32.mrb[0].mxu0
    %478 = vdwg.mxu0
    %v479 = vadd.f32 %v424, %v473
    %v480 = vadd.f32 %v427, %v476
    %v481 = vadd.f32 %v346, %v347
    %v482 = vrot.slane %v481, 4
    %v483 = vadd.f32 %v481, %v482
    %v484 = vrot.slane %v483, 2
    %v485 = vadd.f32 %v483, %v484
    %v486 = vrot.slane %v485, 1
    %v487 = vadd.f32 %v485, %v486
    %v488 = vadd.f32 %v479, %v480
    %v489 = vrot.slane %v488, 4
    %v490 = vadd.f32 %v488, %v489
    %v491 = vrot.slane %v490, 2
    %v492 = vadd.f32 %v490, %v491
    %v493 = vrot.slane %v492, 1
    %v494 = vadd.f32 %v492, %v493
    %v495 = vadd.f32 %v487, %v494
    %v496 = vld [vmem:[#allocation7] sm:$0xff]
    %v497 = vld [vmem:[#allocation7 + $0x8] sm:$0xff]
    %v498 = vld [vmem:[#allocation7 + $0x10] sm:$0xff]
    %v499 = vld [vmem:[#allocation7 + $0x18] sm:$0xff]
    %v500 = vld [vmem:[#allocation7 + $0x20] sm:$0xff]
    %v501 = vld [vmem:[#allocation7 + $0x28] sm:$0xff]
    %v502 = vld [vmem:[#allocation7 + $0x30] sm:$0xff]
    %v503 = vld [vmem:[#allocation7 + $0x38] sm:$0xff]
    %v504 = vld [vmem:[#allocation7 + $0x40] sm:$0xff]
    %v505 = vld [vmem:[#allocation7 + $0x48] sm:$0xff]
    %v506 = vld [vmem:[#allocation7 + $0x50] sm:$0xff]
    %v507 = vld [vmem:[#allocation7 + $0x58] sm:$0xff]
    %v508 = vld [vmem:[#allocation7 + $0x60] sm:$0xff]
    %v509 = vld [vmem:[#allocation7 + $0x68] sm:$0xff]
    %v510 = vld [vmem:[#allocation7 + $0x70] sm:$0xff]
    %v511 = vld [vmem:[#allocation7 + $0x78] sm:$0xff]
    %512 = vmatprep.subr.mxu0 0.0
    %513 = vmatpush1.msra.mxu0 %v496
    %514 = vmatprep.subr.mxu0 0.0
    %515 = vmatpush1.msra.mxu0 %v497
    %516 = vmatprep.subr.mxu0 0.0
    %517 = vmatpush1.msra.mxu0 %v498
    %518 = vmatprep.subr.mxu0 0.0
    %519 = vmatpush1.msra.mxu0 %v499
    %520 = vmatprep.subr.mxu0 0.0
    %521 = vmatpush1.msra.mxu0 %v500
    %522 = vmatprep.subr.mxu0 0.0
    %523 = vmatpush1.msra.mxu0 %v501
    %524 = vmatprep.subr.mxu0 0.0
    %525 = vmatpush1.msra.mxu0 %v502
    %526 = vmatprep.subr.mxu0 0.0
    %527 = vmatpush1.msra.mxu0 %v503
    %528 = vmatprep.subr.mxu0 0.0
    %529 = vmatpush1.msra.mxu0 %v504
    %530 = vmatprep.subr.mxu0 0.0
    %531 = vmatpush1.msra.mxu0 %v505
    %532 = vmatprep.subr.mxu0 0.0
    %533 = vmatpush1.msra.mxu0 %v506
    %534 = vmatprep.subr.mxu0 0.0
    %535 = vmatpush1.msra.mxu0 %v507
    %536 = vmatprep.subr.mxu0 0.0
    %537 = vmatpush1.msra.mxu0 %v508
    %538 = vmatprep.subr.mxu0 0.0
    %539 = vmatpush1.msra.mxu0 %v509
    %540 = vmatprep.subr.mxu0 0.0
    %541 = vmatpush1.msra.mxu0 %v510
    %542 = vmatprep.subr.mxu0 0.0
    %543 = vmatpush1.msra.mxu0 %v511
    %544 = vmatprep.subr.mxu0 0.0
    %545 = vmatpush1.msra.mxu0 0.0
    %546 = vmatprep.subr.mxu0 0.0
    %547 = vmatpush1.msra.mxu0 0.0
    %548 = vmatprep.subr.mxu0 0.0
    %549 = vmatpush1.msra.mxu0 0.0
    %550 = vmatprep.subr.mxu0 0.0
    %551 = vmatpush1.msra.mxu0 0.0
    %552 = vmatprep.subr.mxu0 0.0
    %553 = vmatpush1.msra.mxu0 0.0
    %554 = vmatprep.subr.mxu0 0.0
    %555 = vmatpush1.msra.mxu0 0.0
    %556 = vmatprep.subr.mxu0 0.0
    %557 = vmatpush1.msra.mxu0 0.0
    %558 = vmatprep.subr.mxu0 0.0
    %559 = vmatpush1.msra.mxu0 0.0
    %560 = vmatprep.subr.mxu0 0.0
    %561 = vmatpush1.msra.mxu0 0.0
    %562 = vmatprep.subr.mxu0 0.0
    %563 = vmatpush1.msra.mxu0 0.0
    %564 = vmatprep.subr.mxu0 0.0
    %565 = vmatpush1.msra.mxu0 0.0
    %566 = vmatprep.subr.mxu0 0.0
    %567 = vmatpush1.msra.mxu0 0.0
    %568 = vmatprep.subr.mxu0 0.0
    %569 = vmatpush1.msra.mxu0 0.0
    %570 = vmatprep.subr.mxu0 0.0
    %571 = vmatpush1.msra.mxu0 0.0
    %572 = vmatprep.subr.mxu0 0.0
    %573 = vmatpush1.msra.mxu0 0.0
    %574 = vmatprep.subr.mxu0 0.0
    %575 = vmatpush1.msra.mxu0 0.0
    %576 = vmatprep.mubr.f32.mxu0 0.0
    %577 = vmatmul.mubr.f32.gmra.mrb[0].mxu0 %v495
    %v578 = vpop.f32.mrb[0].mxu0
    %v579 = vadd.f32 0.0, %v578
    %v580 = vpop.f32.mrb[0].mxu0
    %581 = vdwg.mxu0
    %v582 = vmul.f32 %v579, 0.001953125
    %v583 = vlaneseq
    %v584 = vshrl.u32 %v583, 7
    %v585 = vsub.s32 0, %v584
    %v586 = vrot.slane %v582, %v585
    %v587 = vsub.f32 %v346, %v586
    %v588 = vsub.f32 %v347, %v586
    %v589 = vmul.f32 %v587, %v587
    %v590 = vmul.f32 %v588, %v588
    %v591 = vadd.f32 %v589, %v590
    %v592 = vrot.slane %v591, 4
    %v593 = vadd.f32 %v591, %v592
    %v594 = vrot.slane %v593, 2
    %v595 = vadd.f32 %v593, %v594
    %v596 = vrot.slane %v595, 1
    %v597 = vadd.f32 %v595, %v596
    %v598 = vsub.f32 %v479, %v586
    %v599 = vsub.f32 %v480, %v586
    %v600 = vmul.f32 %v598, %v598
    %v601 = vmul.f32 %v599, %v599
    %v602 = vadd.f32 %v600, %v601
    %v603 = vrot.slane %v602, 4
    %v604 = vadd.f32 %v602, %v603
    %v605 = vrot.slane %v604, 2
    %v606 = vadd.f32 %v604, %v605
    %v607 = vrot.slane %v606, 1
    %v608 = vadd.f32 %v606, %v607
    %v609 = vadd.f32 %v597, %v608
    %610 = vmatprep.subr.mxu0 0.0
    %611 = vmatpush1.msra.mxu0 %v496
    %612 = vmatprep.subr.mxu0 0.0
    %613 = vmatpush1.msra.mxu0 %v497
    %614 = vmatprep.subr.mxu0 0.0
    %615 = vmatpush1.msra.mxu0 %v498
    %616 = vmatprep.subr.mxu0 0.0
    %617 = vmatpush1.msra.mxu0 %v499
    %618 = vmatprep.subr.mxu0 0.0
    %619 = vmatpush1.msra.mxu0 %v500
    %620 = vmatprep.subr.mxu0 0.0
    %621 = vmatpush1.msra.mxu0 %v501
    %622 = vmatprep.subr.mxu0 0.0
    %623 = vmatpush1.msra.mxu0 %v502
    %624 = vmatprep.subr.mxu0 0.0
    %625 = vmatpush1.msra.mxu0 %v503
    %626 = vmatprep.subr.mxu0 0.0
    %627 = vmatpush1.msra.mxu0 %v504
    %628 = vmatprep.subr.mxu0 0.0
    %629 = vmatpush1.msra.mxu0 %v505
    %630 = vmatprep.subr.mxu0 0.0
    %631 = vmatpush1.msra.mxu0 %v506
    %632 = vmatprep.subr.mxu0 0.0
    %633 = vmatpush1.msra.mxu0 %v507
    %634 = vmatprep.subr.mxu0 0.0
    %635 = vmatpush1.msra.mxu0 %v508
    %636 = vmatprep.subr.mxu0 0.0
    %637 = vmatpush1.msra.mxu0 %v509
    %638 = vmatprep.subr.mxu0 0.0
    %639 = vmatpush1.msra.mxu0 %v510
    %640 = vmatprep.subr.mxu0 0.0
    %641 = vmatpush1.msra.mxu0 %v511
    %642 = vmatprep.subr.mxu0 0.0
    %643 = vmatpush1.msra.mxu0 0.0
    %644 = vmatprep.subr.mxu0 0.0
    %645 = vmatpush1.msra.mxu0 0.0
    %646 = vmatprep.subr.mxu0 0.0
    %647 = vmatpush1.msra.mxu0 0.0
    %648 = vmatprep.subr.mxu0 0.0
    %649 = vmatpush1.msra.mxu0 0.0
    %650 = vmatprep.subr.mxu0 0.0
    %651 = vmatpush1.msra.mxu0 0.0
    %652 = vmatprep.subr.mxu0 0.0
    %653 = vmatpush1.msra.mxu0 0.0
    %654 = vmatprep.subr.mxu0 0.0
    %655 = vmatpush1.msra.mxu0 0.0
    %656 = vmatprep.subr.mxu0 0.0
    %657 = vmatpush1.msra.mxu0 0.0
    %658 = vmatprep.subr.mxu0 0.0
    %659 = vmatpush1.msra.mxu0 0.0
    %660 = vmatprep.subr.mxu0 0.0
    %661 = vmatpush1.msra.mxu0 0.0
    %662 = vmatprep.subr.mxu0 0.0
    %663 = vmatpush1.msra.mxu0 0.0
    %664 = vmatprep.subr.mxu0 0.0
    %665 = vmatpush1.msra.mxu0 0.0
    %666 = vmatprep.subr.mxu0 0.0
    %667 = vmatpush1.msra.mxu0 0.0
    %668 = vmatprep.subr.mxu0 0.0
    %669 = vmatpush1.msra.mxu0 0.0
    %670 = vmatprep.subr.mxu0 0.0
    %671 = vmatpush1.msra.mxu0 0.0
    %672 = vmatprep.subr.mxu0 0.0
    %673 = vmatpush1.msra.mxu0 0.0
    %674 = vmatprep.mubr.f32.mxu0 0.0
    %675 = vmatmul.mubr.f32.gmra.mrb[0].mxu0 %v609
    %v676 = vpop.f32.mrb[0].mxu0
    %v677 = vadd.f32 0.0, %v676
    %v678 = vpop.f32.mrb[0].mxu0
    %679 = vdwg.mxu0
    %v680 = vmul.f32 %v677, 0.001953125
    %v681 = vld [vmem:[%s3] sm:$0x1]
    %v682 = vadd.f32 %v680, 1e-05
    %v683 = vrsqrt.pop %v682
    %v684 = vmul.f32 %v681, %v683
    %v685 = vld [vmem:[%s4] sm:$0x1]
    %v686 = vmul.f32 %v582, %v684
    %v687 = vsub.f32 %v685, %v686
    %v689 = vlaneseq
    %v690 = vshrl.u32 %v689, 7
    %v691 = vsub.s32 0, %v690
    %v692 = vrot.slane %v684, %v691
    %v694 = vmul.f32 %v346, %v692
    %v695 = vmul.f32 %v347, %v692
    %v697 = vlaneseq
    %v698 = vshrl.u32 %v697, 7
    %v699 = vsub.s32 0, %v698
    %v700 = vrot.slane %v687, %v699
    %v702 = vadd.f32 %v694, %v700
    %v703 = vadd.f32 %v695, %v700
    %v704 = vmul.f32 %v479, %v692
    %v705 = vmul.f32 %v480, %v692
    %v706 = vadd.f32 %v704, %v700
    %v707 = vadd.f32 %v705, %v700
    %v708 = vmax.f32 %v702, %v706
    %v709 = vmax.f32 %v703, %v707
    %712 = vrot.lane.b32.xlu0 %v708, 64
    %v713 = vpop.permute.xlu0 %712
    %714 = vrot.lane.b32.xlu0 %v709, 64
    %v715 = vpop.permute.xlu0 %714
    %v718 = vmax.f32 %v708, %v713
    %v719 = vmax.f32 %v709, %v715
    %v720 = vmax.f32 %v718, 0.0
    %v721 = vmax.f32 %v719, 0.0
    %vm722 = vcmask 516096
    %723 = vst.msk [vmem:[#allocation2] sm:$0x1] %vm722, 0.0
    %724 = vst.msk [vmem:[#allocation2 + $0x10] sm:$0x1] %vm722, 0.0
    %725 = vst.msk [vmem:[#allocation2 + $0x9] sm:$0x1] %vm722, 0.0
    %726 = vst.msk [vmem:[#allocation2 + $0x19] sm:$0x1] %vm722, 0.0
    %727 = vst.msk [vmem:[#allocation2 + $0x1] sm:$0xff] %vm151, %v720
    %728 = vst.msk [vmem:[#allocation2 + $0x11] sm:$0xff] %vm151, %v721
    %v729 = vld [vmem:[#allocation2] sm:$0xff]
    %v730 = vld [vmem:[#allocation2 + $0x10] sm:$0xff]
    %v731 = vld [vmem:[#allocation9] sm:$0xf]
    %v732 = vld [vmem:[#allocation9 + $0x4] sm:$0xf]
    %v733 = vld [vmem:[#allocation9 + $0x8] sm:$0xf]
    %v734 = vld [vmem:[#allocation9 + $0xc] sm:$0xf]
    %v735 = vld [vmem:[#allocation9 + $0x10] sm:$0xf]
    %v736 = vld [vmem:[#allocation9 + $0x14] sm:$0xf]
    %v737 = vld [vmem:[#allocation9 + $0x18] sm:$0xf]
    %v738 = vld [vmem:[#allocation9 + $0x1c] sm:$0xf]
    %v739 = vpack.c.bf16 %v730, %v729
    %v740 = vld [vmem:[#allocation2 + $0x1] sm:$0xff]
    %v741 = vld [vmem:[#allocation2 + $0x11] sm:$0xff]
    %s742 = scalar_lea.vmem [#allocation9], 32
    %v743 = vld [vmem:[%s742] sm:$0xf]
    %v744 = vld [vmem:[%s742 + $0x4] sm:$0xf]
    %v745 = vld [vmem:[%s742 + $0x8] sm:$0xf]
    %v746 = vld [vmem:[%s742 + $0xc] sm:$0xf]
    %v747 = vld [vmem:[%s742 + $0x10] sm:$0xf]
    %v748 = vld [vmem:[%s742 + $0x14] sm:$0xf]
    %v749 = vld [vmem:[%s742 + $0x18] sm:$0xf]
    %v750 = vld [vmem:[%s742 + $0x1c] sm:$0xf]
    %v751 = vpack.c.bf16 %v741, %v740
    %v760 = vunpack.c.l.b16 %v743
    %v761 = vunpack.c.l.b16 %v744
    %v762 = vunpack.c.l.b16 %v745
    %v763 = vunpack.c.l.b16 %v746
    %v764 = vunpack.c.l.b16 %v747
    %v765 = vunpack.c.l.b16 %v748
    %v766 = vunpack.c.l.b16 %v749
    %v767 = vunpack.c.l.b16 %v750
    %v768 = vpack.c.b16 %v761, %v760
    %v769 = vpack.c.b16 %v763, %v762
    %v770 = vpack.c.b16 %v765, %v764
    %v771 = vpack.c.b16 %v767, %v766
    %v777 = vsel %vm151, %v751, 0
    %779 = vmatprep.subr.bf16.mxu0 0
    %780 = vmatpush1.bf16.msra.mxu0 %v768
    %781 = vmatprep.subr.bf16.mxu0 0
    %782 = vmatpush1.bf16.msra.mxu0 %v769
    %783 = vmatprep.subr.bf16.mxu0 0
    %784 = vmatpush1.bf16.msra.mxu0 %v770
    %785 = vmatprep.subr.bf16.mxu0 0
    %786 = vmatpush1.bf16.msra.mxu0 %v771
    %787 = vmatprep.subr.bf16.mxu0 0
    %788 = vmatpush1.bf16.msra.mxu0 0
    %789 = vmatprep.subr.bf16.mxu0 0
    %790 = vmatpush1.bf16.msra.mxu0 0
    %791 = vmatprep.subr.bf16.mxu0 0
    %792 = vmatpush1.bf16.msra.mxu0 0
    %793 = vmatprep.subr.bf16.mxu0 0
    %794 = vmatpush1.bf16.msra.mxu0 0
    %795 = vmatprep.subr.bf16.mxu0 0
    %796 = vmatpush1.bf16.msra.mxu0 0
    %797 = vmatprep.subr.bf16.mxu0 0
    %798 = vmatpush1.bf16.msra.mxu0 0
    %799 = vmatprep.subr.bf16.mxu0 0
    %800 = vmatpush1.bf16.msra.mxu0 0
    %801 = vmatprep.subr.bf16.mxu0 0
    %802 = vmatpush1.bf16.msra.mxu0 0
    %803 = vmatprep.subr.bf16.mxu0 0
    %804 = vmatpush1.bf16.msra.mxu0 0
    %805 = vmatprep.subr.bf16.mxu0 0
    %806 = vmatpush1.bf16.msra.mxu0 0
    %807 = vmatprep.subr.bf16.mxu0 0
    %808 = vmatpush1.bf16.msra.mxu0 0
    %809 = vmatprep.subr.bf16.mxu0 0
    %810 = vmatpush1.bf16.msra.mxu0 0
    %811 = vmatprep.mubr.bf16.mxu0 0
    %812 = vmatmul.mubr.bf16.gmra.mrb[0].mxu0 %v777
    %v813 = vpop.f32.mrb[0].mxu0
    %v814 = vadd.f32 0.0, %v813
    %v815 = vpop.f32.mrb[0].mxu0
    %v816 = vpop.f32.mrb[0].mxu0
    %v817 = vadd.f32 0.0, %v816
    %v818 = vpop.f32.mrb[0].mxu0
    %819 = vdwg.mxu0
    %v828 = vunpack.c.l.b16 %v731
    %v829 = vunpack.c.l.b16 %v732
    %v830 = vunpack.c.l.b16 %v733
    %v831 = vunpack.c.l.b16 %v734
    %v832 = vunpack.c.l.b16 %v735
    %v833 = vunpack.c.l.b16 %v736
    %v834 = vunpack.c.l.b16 %v737
    %v835 = vunpack.c.l.b16 %v738
    %v836 = vpack.c.b16 %v829, %v828
    %v837 = vpack.c.b16 %v831, %v830
    %v838 = vpack.c.b16 %v833, %v832
    %v839 = vpack.c.b16 %v835, %v834
    %v845 = vsel %vm151, %v739, 0
    %847 = vmatprep.subr.bf16.mxu0 0
    %848 = vmatpush1.bf16.msra.mxu0 %v836
    %849 = vmatprep.subr.bf16.mxu0 0
    %850 = vmatpush1.bf16.msra.mxu0 %v837
    %851 = vmatprep.subr.bf16.mxu0 0
    %852 = vmatpush1.bf16.msra.mxu0 %v838
    %853 = vmatprep.subr.bf16.mxu0 0
    %854 = vmatpush1.bf16.msra.mxu0 %v839
    %855 = vmatprep.subr.bf16.mxu0 0
    %856 = vmatpush1.bf16.msra.mxu0 0
    %857 = vmatprep.subr.bf16.mxu0 0
    %858 = vmatpush1.bf16.msra.mxu0 0
    %859 = vmatprep.subr.bf16.mxu0 0
    %860 = vmatpush1.bf16.msra.mxu0 0
    %861 = vmatprep.subr.bf16.mxu0 0
    %862 = vmatpush1.bf16.msra.mxu0 0
    %863 = vmatprep.subr.bf16.mxu0 0
    %864 = vmatpush1.bf16.msra.mxu0 0
    %865 = vmatprep.subr.bf16.mxu0 0
    %866 = vmatpush1.bf16.msra.mxu0 0
    %867 = vmatprep.subr.bf16.mxu0 0
    %868 = vmatpush1.bf16.msra.mxu0 0
    %869 = vmatprep.subr.bf16.mxu0 0
    %870 = vmatpush1.bf16.msra.mxu0 0
    %871 = vmatprep.subr.bf16.mxu0 0
    %872 = vmatpush1.bf16.msra.mxu0 0
    %873 = vmatprep.subr.bf16.mxu0 0
    %874 = vmatpush1.bf16.msra.mxu0 0
    %875 = vmatprep.subr.bf16.mxu0 0
    %876 = vmatpush1.bf16.msra.mxu0 0
    %877 = vmatprep.subr.bf16.mxu0 0
    %878 = vmatpush1.bf16.msra.mxu0 0
    %879 = vmatprep.mubr.bf16.mxu0 0
    %880 = vmatmul.mubr.bf16.gmra.mrb[0].mxu0 %v845
    %v881 = vpop.f32.mrb[0].mxu0
    %v882 = vadd.f32 %v814, %v881
    %v883 = vpop.f32.mrb[0].mxu0
    %v884 = vpop.f32.mrb[0].mxu0
    %v885 = vadd.f32 %v817, %v884
    %v886 = vpop.f32.mrb[0].mxu0
    %887 = vdwg.mxu0
    %v888 = vld [vmem:[#allocation2 + $0x2] sm:$0xff]
    %v889 = vld [vmem:[#allocation2 + $0x12] sm:$0xff]
    %s890 = scalar_lea.vmem [#allocation9], 64
    %v891 = vld [vmem:[%s890] sm:$0xf]
    %v892 = vld [vmem:[%s890 + $0x4] sm:$0xf]
    %v893 = vld [vmem:[%s890 + $0x8] sm:$0xf]
    %v894 = vld [vmem:[%s890 + $0xc] sm:$0xf]
    %v895 = vld [vmem:[%s890 + $0x10] sm:$0xf]
    %v896 = vld [vmem:[%s890 + $0x14] sm:$0xf]
    %v897 = vld [vmem:[%s890 + $0x18] sm:$0xf]
    %v898 = vld [vmem:[%s890 + $0x1c] sm:$0xf]
    %v899 = vpack.c.bf16 %v889, %v888
    %v908 = vunpack.c.l.b16 %v891
    %v909 = vunpack.c.l.b16 %v892
    %v910 = vunpack.c.l.b16 %v893
    %v911 = vunpack.c.l.b16 %v894
    %v912 = vunpack.c.l.b16 %v895
    %v913 = vunpack.c.l.b16 %v896
    %v914 = vunpack.c.l.b16 %v897
    %v915 = vunpack.c.l.b16 %v898
    %v916 = vpack.c.b16 %v909, %v908
    %v917 = vpack.c.b16 %v911, %v910
    %v918 = vpack.c.b16 %v913, %v912
    %v919 = vpack.c.b16 %v915, %v914
    %v925 = vsel %vm151, %v899, 0
    %927 = vmatprep.subr.bf16.mxu0 0
    %928 = vmatpush1.bf16.msra.mxu0 %v916
    %929 = vmatprep.subr.bf16.mxu0 0
    %930 = vmatpush1.bf16.msra.mxu0 %v917
    %931 = vmatprep.subr.bf16.mxu0 0
    %932 = vmatpush1.bf16.msra.mxu0 %v918
    %933 = vmatprep.subr.bf16.mxu0 0
    %934 = vmatpush1.bf16.msra.mxu0 %v919
    %935 = vmatprep.subr.bf16.mxu0 0
    %936 = vmatpush1.bf16.msra.mxu0 0
    %937 = vmatprep.subr.bf16.mxu0 0
    %938 = vmatpush1.bf16.msra.mxu0 0
    %939 = vmatprep.subr.bf16.mxu0 0
    %940 = vmatpush1.bf16.msra.mxu0 0
    %941 = vmatprep.subr.bf16.mxu0 0
    %942 = vmatpush1.bf16.msra.mxu0 0
    %943 = vmatprep.subr.bf16.mxu0 0
    %944 = vmatpush1.bf16.msra.mxu0 0
    %945 = vmatprep.subr.bf16.mxu0 0
    %946 = vmatpush1.bf16.msra.mxu0 0
    %947 = vmatprep.subr.bf16.mxu0 0
    %948 = vmatpush1.bf16.msra.mxu0 0
    %949 = vmatprep.subr.bf16.mxu0 0
    %950 = vmatpush1.bf16.msra.mxu0 0
    %951 = vmatprep.subr.bf16.mxu0 0
    %952 = vmatpush1.bf16.msra.mxu0 0
    %953 = vmatprep.subr.bf16.mxu0 0
    %954 = vmatpush1.bf16.msra.mxu0 0
    %955 = vmatprep.subr.bf16.mxu0 0
    %956 = vmatpush1.bf16.msra.mxu0 0
    %957 = vmatprep.subr.bf16.mxu0 0
    %958 = vmatpush1.bf16.msra.mxu0 0
    %959 = vmatprep.mubr.bf16.mxu0 0
    %960 = vmatmul.mubr.bf16.gmra.mrb[0].mxu0 %v925
    %v961 = vpop.f32.mrb[0].mxu0
    %v962 = vadd.f32 0.0, %v961
    %v963 = vpop.f32.mrb[0].mxu0
    %v964 = vpop.f32.mrb[0].mxu0
    %v965 = vadd.f32 0.0, %v964
    %v966 = vpop.f32.mrb[0].mxu0
    %967 = vdwg.mxu0
    %v968 = vadd.f32 %v882, %v962
    %v969 = vadd.f32 %v885, %v965
    %v970 = vadd.f32 %v968, %v969
    %v971 = vrot.slane %v970, 4
    %v972 = vadd.f32 %v970, %v971
    %v973 = vrot.slane %v972, 2
    %v974 = vadd.f32 %v972, %v973
    %v975 = vrot.slane %v974, 1
    %v976 = vadd.f32 %v974, %v975
    %v977 = vld [vmem:[#allocation10] sm:$0xff]
    %v978 = vld [vmem:[#allocation10 + $0x8] sm:$0xff]
    %v979 = vld [vmem:[#allocation10 + $0x10] sm:$0xff]
    %v980 = vld [vmem:[#allocation10 + $0x18] sm:$0xff]
    %v981 = vld [vmem:[#allocation10 + $0x20] sm:$0xff]
    %v982 = vld [vmem:[#allocation10 + $0x28] sm:$0xff]
    %v983 = vld [vmem:[#allocation10 + $0x30] sm:$0xff]
    %v984 = vld [vmem:[#allocation10 + $0x38] sm:$0xff]
    %v985 = vld [vmem:[#allocation10 + $0x40] sm:$0xff]
    %v986 = vld [vmem:[#allocation10 + $0x48] sm:$0xff]
    %v987 = vld [vmem:[#allocation10 + $0x50] sm:$0xff]
    %v988 = vld [vmem:[#allocation10 + $0x58] sm:$0xff]
    %v989 = vld [vmem:[#allocation10 + $0x60] sm:$0xff]
    %v990 = vld [vmem:[#allocation10 + $0x68] sm:$0xff]
    %v991 = vld [vmem:[#allocation10 + $0x70] sm:$0xff]
    %v992 = vld [vmem:[#allocation10 + $0x78] sm:$0xff]
    %993 = vmatprep.subr.mxu0 0.0
    %994 = vmatpush1.msra.mxu0 %v977
    %995 = vmatprep.subr.mxu0 0.0
    %996 = vmatpush1.msra.mxu0 %v978
    %997 = vmatprep.subr.mxu0 0.0
    %998 = vmatpush1.msra.mxu0 %v979
    %999 = vmatprep.subr.mxu0 0.0
    %1000 = vmatpush1.msra.mxu0 %v980
    %1001 = vmatprep.subr.mxu0 0.0
    %1002 = vmatpush1.msra.mxu0 %v981
    %1003 = vmatprep.subr.mxu0 0.0
    %1004 = vmatpush1.msra.mxu0 %v982
    %1005 = vmatprep.subr.mxu0 0.0
    %1006 = vmatpush1.msra.mxu0 %v983
    %1007 = vmatprep.subr.mxu0 0.0
    %1008 = vmatpush1.msra.mxu0 %v984
    %1009 = vmatprep.subr.mxu0 0.0
    %1010 = vmatpush1.msra.mxu0 %v985
    %1011 = vmatprep.subr.mxu0 0.0
    %1012 = vmatpush1.msra.mxu0 %v986
    %1013 = vmatprep.subr.mxu0 0.0
    %1014 = vmatpush1.msra.mxu0 %v987
    %1015 = vmatprep.subr.mxu0 0.0
    %1016 = vmatpush1.msra.mxu0 %v988
    %1017 = vmatprep.subr.mxu0 0.0
    %1018 = vmatpush1.msra.mxu0 %v989
    %1019 = vmatprep.subr.mxu0 0.0
    %1020 = vmatpush1.msra.mxu0 %v990
    %1021 = vmatprep.subr.mxu0 0.0
    %1022 = vmatpush1.msra.mxu0 %v991
    %1023 = vmatprep.subr.mxu0 0.0
    %1024 = vmatpush1.msra.mxu0 %v992
    %1025 = vmatprep.subr.mxu0 0.0
    %1026 = vmatpush1.msra.mxu0 0.0
    %1027 = vmatprep.subr.mxu0 0.0
    %1028 = vmatpush1.msra.mxu0 0.0
    %1029 = vmatprep.subr.mxu0 0.0
    %1030 = vmatpush1.msra.mxu0 0.0
    %1031 = vmatprep.subr.mxu0 0.0
    %1032 = vmatpush1.msra.mxu0 0.0
    %1033 = vmatprep.subr.mxu0 0.0
    %1034 = vmatpush1.msra.mxu0 0.0
    %1035 = vmatprep.subr.mxu0 0.0
    %1036 = vmatpush1.msra.mxu0 0.0
    %1037 = vmatprep.subr.mxu0 0.0
    %1038 = vmatpush1.msra.mxu0 0.0
    %1039 = vmatprep.subr.mxu0 0.0
    %1040 = vmatpush1.msra.mxu0 0.0
    %1041 = vmatprep.subr.mxu0 0.0
    %1042 = vmatpush1.msra.mxu0 0.0
    %1043 = vmatprep.subr.mxu0 0.0
    %1044 = vmatpush1.msra.mxu0 0.0
    %1045 = vmatprep.subr.mxu0 0.0
    %1046 = vmatpush1.msra.mxu0 0.0
    %1047 = vmatprep.subr.mxu0 0.0
    %1048 = vmatpush1.msra.mxu0 0.0
    %1049 = vmatprep.subr.mxu0 0.0
    %1050 = vmatpush1.msra.mxu0 0.0
    %1051 = vmatprep.subr.mxu0 0.0
    %1052 = vmatpush1.msra.mxu0 0.0
    %1053 = vmatprep.subr.mxu0 0.0
    %1054 = vmatpush1.msra.mxu0 0.0
    %1055 = vmatprep.subr.mxu0 0.0
    %1056 = vmatpush1.msra.mxu0 0.0
    %1057 = vmatprep.mubr.f32.mxu0 0.0
    %1058 = vmatmul.mubr.f32.gmra.mrb[0].mxu0 %v976
    %v1059 = vpop.f32.mrb[0].mxu0
    %v1060 = vadd.f32 0.0, %v1059
    %v1061 = vpop.f32.mrb[0].mxu0
    %1062 = vdwg.mxu0
    %v1063 = vmul.f32 %v1060, 0.0078125
    %v1064 = vlaneseq
    %v1065 = vshrl.u32 %v1064, 7
    %v1066 = vsub.s32 0, %v1065
    %v1067 = vrot.slane %v1063, %v1066
    %v1068 = vsub.f32 %v968, %v1067
    %v1069 = vsub.f32 %v969, %v1067
    %v1070 = vmul.f32 %v1068, %v1068
    %v1071 = vmul.f32 %v1069, %v1069
    %v1072 = vadd.f32 %v1070, %v1071
    %v1073 = vrot.slane %v1072, 4
    %v1074 = vadd.f32 %v1072, %v1073
    %v1075 = vrot.slane %v1074, 2
    %v1076 = vadd.f32 %v1074, %v1075
    %v1077 = vrot.slane %v1076, 1
    %v1078 = vadd.f32 %v1076, %v1077
    %1079 = vmatprep.subr.mxu0 0.0
    %1080 = vmatpush1.msra.mxu0 %v977
    %1081 = vmatprep.subr.mxu0 0.0
    %1082 = vmatpush1.msra.mxu0 %v978
    %1083 = vmatprep.subr.mxu0 0.0
    %1084 = vmatpush1.msra.mxu0 %v979
    %1085 = vmatprep.subr.mxu0 0.0
    %1086 = vmatpush1.msra.mxu0 %v980
    %1087 = vmatprep.subr.mxu0 0.0
    %1088 = vmatpush1.msra.mxu0 %v981
    %1089 = vmatprep.subr.mxu0 0.0
    %1090 = vmatpush1.msra.mxu0 %v982
    %1091 = vmatprep.subr.mxu0 0.0
    %1092 = vmatpush1.msra.mxu0 %v983
    %1093 = vmatprep.subr.mxu0 0.0
    %1094 = vmatpush1.msra.mxu0 %v984
    %1095 = vmatprep.subr.mxu0 0.0
    %1096 = vmatpush1.msra.mxu0 %v985
    %1097 = vmatprep.subr.mxu0 0.0
    %1098 = vmatpush1.msra.mxu0 %v986
    %1099 = vmatprep.subr.mxu0 0.0
    %1100 = vmatpush1.msra.mxu0 %v987
    %1101 = vmatprep.subr.mxu0 0.0
    %1102 = vmatpush1.msra.mxu0 %v988
    %1103 = vmatprep.subr.mxu0 0.0
    %1104 = vmatpush1.msra.mxu0 %v989
    %1105 = vmatprep.subr.mxu0 0.0
    %1106 = vmatpush1.msra.mxu0 %v990
    %1107 = vmatprep.subr.mxu0 0.0
    %1108 = vmatpush1.msra.mxu0 %v991
    %1109 = vmatprep.subr.mxu0 0.0
    %1110 = vmatpush1.msra.mxu0 %v992
    %1111 = vmatprep.subr.mxu0 0.0
    %1112 = vmatpush1.msra.mxu0 0.0
    %1113 = vmatprep.subr.mxu0 0.0
    %1114 = vmatpush1.msra.mxu0 0.0
    %1115 = vmatprep.subr.mxu0 0.0
    %1116 = vmatpush1.msra.mxu0 0.0
    %1117 = vmatprep.subr.mxu0 0.0
    %1118 = vmatpush1.msra.mxu0 0.0
    %1119 = vmatprep.subr.mxu0 0.0
    %1120 = vmatpush1.msra.mxu0 0.0
    %1121 = vmatprep.subr.mxu0 0.0
    %1122 = vmatpush1.msra.mxu0 0.0
    %1123 = vmatprep.subr.mxu0 0.0
    %1124 = vmatpush1.msra.mxu0 0.0
    %1125 = vmatprep.subr.mxu0 0.0
    %1126 = vmatpush1.msra.mxu0 0.0
    %1127 = vmatprep.subr.mxu0 0.0
    %1128 = vmatpush1.msra.mxu0 0.0
    %1129 = vmatprep.subr.mxu0 0.0
    %1130 = vmatpush1.msra.mxu0 0.0
    %1131 = vmatprep.subr.mxu0 0.0
    %1132 = vmatpush1.msra.mxu0 0.0
    %1133 = vmatprep.subr.mxu0 0.0
    %1134 = vmatpush1.msra.mxu0 0.0
    %1135 = vmatprep.subr.mxu0 0.0
    %1136 = vmatpush1.msra.mxu0 0.0
    %1137 = vmatprep.subr.mxu0 0.0
    %1138 = vmatpush1.msra.mxu0 0.0
    %1139 = vmatprep.subr.mxu0 0.0
    %1140 = vmatpush1.msra.mxu0 0.0
    %1141 = vmatprep.subr.mxu0 0.0
    %1142 = vmatpush1.msra.mxu0 0.0
    %1143 = vmatprep.mubr.f32.mxu0 0.0
    %1144 = vmatmul.mubr.f32.gmra.mrb[0].mxu0 %v1078
    %v1145 = vpop.f32.mrb[0].mxu0
    %v1146 = vadd.f32 0.0, %v1145
    %v1147 = vpop.f32.mrb[0].mxu0
    %1148 = vdwg.mxu0
    %v1149 = vmul.f32 %v1146, 0.0078125
    %v1150 = vld [vmem:[%s7] sm:$0x1]
    %v1151 = vadd.f32 %v1149, 1e-05
    %v1152 = vrsqrt.pop %v1151
    %v1153 = vmul.f32 %v1150, %v1152
    %v1154 = vld [vmem:[%s8] sm:$0x1]
    %v1155 = vmul.f32 %v1063, %v1153
    %v1156 = vsub.f32 %v1154, %v1155
    %v1158 = vlaneseq
    %v1159 = vshrl.u32 %v1158, 7
    %v1160 = vsub.s32 0, %v1159
    %v1161 = vrot.slane %v1153, %v1160
    %v1163 = vmul.f32 %v968, %v1161
    %v1164 = vmul.f32 %v969, %v1161
    %v1166 = vlaneseq
    %v1167 = vshrl.u32 %v1166, 7
    %v1168 = vsub.s32 0, %v1167
    %v1169 = vrot.slane %v1156, %v1168
    %v1171 = vadd.f32 %v1163, %v1169
    %v1172 = vadd.f32 %v1164, %v1169
    %v1173 = vmax.f32 %v1171, 0.0
    %v1174 = vmax.f32 %v1172, 0.0
    %v1178 = vunpack.c.l.s4 1983009808
    %v1179 = vunpack.c.0.s8 %v1178
    %v1180 = vlaneseq
    %v1181 = vshrl.u32 %v1180, 7
    %v1182 = vsub.s32 %v1179, %v1181
    %v1183 = vrot.slane %v1173, %v1182
    %v1185 = vunpack.c.l.s4 1983009808
    %v1186 = vunpack.c.0.s8 %v1185
    %v1187 = vlaneseq
    %v1188 = vshrl.u32 %v1187, 7
    %v1189 = vsub.s32 %v1186, %v1188
    %v1190 = vrot.slane %v1174, %v1189
    %vm1191 = vcmask 1044484
    %v1192 = vsel %vm1191, %v1183, %v1183
    %vm1193 = vcmask 1046534
    %v1194 = vsel %vm1193, %v1183, %v1192
    %v1195 = vrot.slane %v1190, 7
    %vm1196 = vcmask 1041409
    %v1197 = vsel %vm1196, %v1195, %v1194
    %vm1198 = vcmask 1043459
    %v1199 = vsel %vm1198, %v1195, %v1197
    %vm1200 = vcmask 1045509
    %v1201 = vsel %vm1200, %v1195, %v1199
    %vm1202 = vcmask 1047559
    %v1203 = vsel %vm1202, %v1195, %v1201
    %1205 = vst [vmem:[#allocation3] sm:$0x3] %v1203
    %v1206 = vrot.slane %v1183, 1
    %v1207 = vsel %vm1191, %v1206, %v1206
    %v1208 = vsel %vm1193, %v1206, %v1207
    %v1209 = vsel %vm1196, %v1190, %v1208
    %v1210 = vsel %vm1198, %v1190, %v1209
    %v1211 = vsel %vm1200, %v1190, %v1210
    %v1212 = vsel %vm1202, %v1190, %v1211
    %1214 = vst [vmem:[#allocation3 + $0x2] sm:$0x3] %v1212
    %v1215 = vcombine.high %v1183, %v1183
    %v1216 = vcombine.high %v1190, %v1190
    %v1217 = vsel %vm1191, %v1215, %v1215
    %v1218 = vsel %vm1193, %v1215, %v1217
    %v1219 = vrot.slane %v1216, 7
    %v1220 = vsel %vm1196, %v1219, %v1218
    %v1221 = vsel %vm1198, %v1219, %v1220
    %v1222 = vsel %vm1200, %v1219, %v1221
    %v1223 = vsel %vm1202, %v1219, %v1222
    %1225 = vst [vmem:[#allocation3 + $0x4] sm:$0x3] %v1223
    %v1226 = vrot.slane %v1215, 1
    %v1227 = vsel %vm1191, %v1226, %v1226
    %v1228 = vsel %vm1193, %v1226, %v1227
    %v1229 = vsel %vm1196, %v1216, %v1228
    %v1230 = vsel %vm1198, %v1216, %v1229
    %v1231 = vsel %vm1200, %v1216, %v1230
    %v1232 = vsel %vm1202, %v1216, %v1231
    %1234 = vst [vmem:[#allocation3 + $0x6] sm:$0x3] %v1232
    %v1235 = vcombine.high %v1173, %v1173
    %v1237 = vunpack.c.l.s4 1983009808
    %v1238 = vunpack.c.0.s8 %v1237
    %v1239 = vlaneseq
    %v1240 = vshrl.u32 %v1239, 7
    %v1241 = vsub.s32 %v1238, %v1240
    %v1242 = vrot.slane %v1235, %v1241
    %v1243 = vcombine.high %v1174, %v1174
    %v1245 = vunpack.c.l.s4 1983009808
    %v1246 = vunpack.c.0.s8 %v1245
    %v1247 = vlaneseq
    %v1248 = vshrl.u32 %v1247, 7
    %v1249 = vsub.s32 %v1246, %v1248
    %v1250 = vrot.slane %v1243, %v1249
    %v1251 = vsel %vm1191, %v1242, %v1242
    %v1252 = vsel %vm1193, %v1242, %v1251
    %v1253 = vrot.slane %v1250, 7
    %v1254 = vsel %vm1196, %v1253, %v1252
    %v1255 = vsel %vm1198, %v1253, %v1254
    %v1256 = vsel %vm1200, %v1253, %v1255
    %v1257 = vsel %vm1202, %v1253, %v1256
    %1259 = vst [vmem:[#allocation3 + $0x8] sm:$0x3] %v1257
    %v1260 = vrot.slane %v1242, 1
    %v1261 = vsel %vm1191, %v1260, %v1260
    %v1262 = vsel %vm1193, %v1260, %v1261
    %v1263 = vsel %vm1196, %v1250, %v1262
    %v1264 = vsel %vm1198, %v1250, %v1263
    %v1265 = vsel %vm1200, %v1250, %v1264
    %v1266 = vsel %vm1202, %v1250, %v1265
    %1268 = vst [vmem:[#allocation3 + $0xa] sm:$0x3] %v1266
    %v1269 = vcombine.high %v1242, %v1242
    %v1270 = vcombine.high %v1250, %v1250
    %v1271 = vsel %vm1191, %v1269, %v1269
    %v1272 = vsel %vm1193, %v1269, %v1271
    %v1273 = vrot.slane %v1270, 7
    %v1274 = vsel %vm1196, %v1273, %v1272
    %v1275 = vsel %vm1198, %v1273, %v1274
    %v1276 = vsel %vm1200, %v1273, %v1275
    %v1277 = vsel %vm1202, %v1273, %v1276
    %1279 = vst [vmem:[#allocation3 + $0xc] sm:$0x3] %v1277
    %v1280 = vrot.slane %v1269, 1
    %v1281 = vsel %vm1191, %v1280, %v1280
    %v1282 = vsel %vm1193, %v1280, %v1281
    %v1283 = vsel %vm1196, %v1270, %v1282
    %v1284 = vsel %vm1198, %v1270, %v1283
    %v1285 = vsel %vm1200, %v1270, %v1284
    %v1286 = vsel %vm1202, %v1270, %v1285
    %1288 = vst [vmem:[#allocation3 + $0xe] sm:$0x3] %v1286
    %v1289 = vld [vmem:[#allocation3] sm:$0xff]
    %v1290 = vld [vmem:[#allocation3 + $0x8] sm:$0xff]
    %v1291 = vld [vmem:[%s9] sm:$0xf]
    %v1292 = vld [vmem:[%s9 + $0x4] sm:$0xf]
    %v1293 = vld [vmem:[%s9 + $0x8] sm:$0xf]
    %v1294 = vld [vmem:[%s9 + $0xc] sm:$0xf]
    %v1295 = vld [vmem:[%s9 + $0x10] sm:$0xf]
    %v1296 = vld [vmem:[%s9 + $0x14] sm:$0xf]
    %v1297 = vld [vmem:[%s9 + $0x18] sm:$0xf]
    %v1298 = vld [vmem:[%s9 + $0x1c] sm:$0xf]
    %v1299 = vld [vmem:[%s9 + $0x20] sm:$0xf]
    %v1300 = vld [vmem:[%s9 + $0x24] sm:$0xf]
    %v1301 = vld [vmem:[%s9 + $0x28] sm:$0xf]
    %v1302 = vld [vmem:[%s9 + $0x2c] sm:$0xf]
    %v1303 = vld [vmem:[%s9 + $0x30] sm:$0xf]
    %v1304 = vld [vmem:[%s9 + $0x34] sm:$0xf]
    %v1305 = vld [vmem:[%s9 + $0x38] sm:$0xf]
    %v1306 = vld [vmem:[%s9 + $0x3c] sm:$0xf]
    %v1307 = vld [vmem:[%s9 + $0x40] sm:$0xf]
    %v1308 = vld [vmem:[%s9 + $0x44] sm:$0xf]
    %v1309 = vld [vmem:[%s9 + $0x48] sm:$0xf]
    %v1310 = vld [vmem:[%s9 + $0x4c] sm:$0xf]
    %v1311 = vld [vmem:[%s9 + $0x50] sm:$0xf]
    %v1312 = vld [vmem:[%s9 + $0x54] sm:$0xf]
    %v1313 = vld [vmem:[%s9 + $0x58] sm:$0xf]
    %v1314 = vld [vmem:[%s9 + $0x5c] sm:$0xf]
    %v1315 = vld [vmem:[%s9 + $0x60] sm:$0xf]
    %v1316 = vld [vmem:[%s9 + $0x64] sm:$0xf]
    %v1317 = vld [vmem:[%s9 + $0x68] sm:$0xf]
    %v1318 = vld [vmem:[%s9 + $0x6c] sm:$0xf]
    %v1319 = vld [vmem:[%s9 + $0x70] sm:$0xf]
    %v1320 = vld [vmem:[%s9 + $0x74] sm:$0xf]
    %v1321 = vld [vmem:[%s9 + $0x78] sm:$0xf]
    %v1322 = vld [vmem:[%s9 + $0x7c] sm:$0xf]
    %v1323 = vld [vmem:[%s9 + $0x80] sm:$0xf]
    %v1324 = vld [vmem:[%s9 + $0x84] sm:$0xf]
    %v1325 = vld [vmem:[%s9 + $0x88] sm:$0xf]
    %v1326 = vld [vmem:[%s9 + $0x8c] sm:$0xf]
    %v1327 = vld [vmem:[%s9 + $0x90] sm:$0xf]
    %v1328 = vld [vmem:[%s9 + $0x94] sm:$0xf]
    %v1329 = vld [vmem:[%s9 + $0x98] sm:$0xf]
    %v1330 = vld [vmem:[%s9 + $0x9c] sm:$0xf]
    %v1331 = vld [vmem:[%s9 + $0xa0] sm:$0xf]
    %v1332 = vld [vmem:[%s9 + $0xa4] sm:$0xf]
    %v1333 = vld [vmem:[%s9 + $0xa8] sm:$0xf]
    %v1334 = vld [vmem:[%s9 + $0xac] sm:$0xf]
    %v1335 = vld [vmem:[%s9 + $0xb0] sm:$0xf]
    %v1336 = vld [vmem:[%s9 + $0xb4] sm:$0xf]
    %v1337 = vld [vmem:[%s9 + $0xb8] sm:$0xf]
    %v1338 = vld [vmem:[%s9 + $0xbc] sm:$0xf]
    %v1339 = vld [vmem:[%s9 + $0xc0] sm:$0xf]
    %v1340 = vld [vmem:[%s9 + $0xc4] sm:$0xf]
    %v1341 = vld [vmem:[%s9 + $0xc8] sm:$0xf]
    %v1342 = vld [vmem:[%s9 + $0xcc] sm:$0xf]
    %v1343 = vld [vmem:[%s9 + $0xd0] sm:$0xf]
    %v1344 = vld [vmem:[%s9 + $0xd4] sm:$0xf]
    %v1345 = vld [vmem:[%s9 + $0xd8] sm:$0xf]
    %v1346 = vld [vmem:[%s9 + $0xdc] sm:$0xf]
    %v1347 = vld [vmem:[%s9 + $0xe0] sm:$0xf]
    %v1348 = vld [vmem:[%s9 + $0xe4] sm:$0xf]
    %v1349 = vld [vmem:[%s9 + $0xe8] sm:$0xf]
    %v1350 = vld [vmem:[%s9 + $0xec] sm:$0xf]
    %v1351 = vld [vmem:[%s9 + $0xf0] sm:$0xf]
    %v1352 = vld [vmem:[%s9 + $0xf4] sm:$0xf]
    %v1353 = vld [vmem:[%s9 + $0xf8] sm:$0xf]
    %v1354 = vld [vmem:[%s9 + $0xfc] sm:$0xf]
    %v1355 = vld [vmem:[%s9 + $0x100] sm:$0xf]
    %v1356 = vld [vmem:[%s9 + $0x104] sm:$0xf]
    %v1357 = vld [vmem:[%s9 + $0x108] sm:$0xf]
    %v1358 = vld [vmem:[%s9 + $0x10c] sm:$0xf]
    %v1359 = vld [vmem:[%s9 + $0x110] sm:$0xf]
    %v1360 = vld [vmem:[%s9 + $0x114] sm:$0xf]
    %v1361 = vld [vmem:[%s9 + $0x118] sm:$0xf]
    %v1362 = vld [vmem:[%s9 + $0x11c] sm:$0xf]
    %v1363 = vld [vmem:[%s9 + $0x120] sm:$0xf]
    %v1364 = vld [vmem:[%s9 + $0x124] sm:$0xf]
    %v1365 = vld [vmem:[%s9 + $0x128] sm:$0xf]
    %v1366 = vld [vmem:[%s9 + $0x12c] sm:$0xf]
    %v1367 = vld [vmem:[%s9 + $0x130] sm:$0xf]
    %v1368 = vld [vmem:[%s9 + $0x134] sm:$0xf]
    %v1369 = vld [vmem:[%s9 + $0x138] sm:$0xf]
    %v1370 = vld [vmem:[%s9 + $0x13c] sm:$0xf]
    %v1371 = vld [vmem:[%s9 + $0x140] sm:$0xf]
    %v1372 = vld [vmem:[%s9 + $0x144] sm:$0xf]
    %v1373 = vld [vmem:[%s9 + $0x148] sm:$0xf]
    %v1374 = vld [vmem:[%s9 + $0x14c] sm:$0xf]
    %v1375 = vld [vmem:[%s9 + $0x150] sm:$0xf]
    %v1376 = vld [vmem:[%s9 + $0x154] sm:$0xf]
    %v1377 = vld [vmem:[%s9 + $0x158] sm:$0xf]
    %v1378 = vld [vmem:[%s9 + $0x15c] sm:$0xf]
    %v1379 = vld [vmem:[%s9 + $0x160] sm:$0xf]
    %v1380 = vld [vmem:[%s9 + $0x164] sm:$0xf]
    %v1381 = vld [vmem:[%s9 + $0x168] sm:$0xf]
    %v1382 = vld [vmem:[%s9 + $0x16c] sm:$0xf]
    %v1383 = vld [vmem:[%s9 + $0x170] sm:$0xf]
    %v1384 = vld [vmem:[%s9 + $0x174] sm:$0xf]
    %v1385 = vld [vmem:[%s9 + $0x178] sm:$0xf]
    %v1386 = vld [vmem:[%s9 + $0x17c] sm:$0xf]
    %v1387 = vld [vmem:[%s9 + $0x180] sm:$0xf]
    %v1388 = vld [vmem:[%s9 + $0x184] sm:$0xf]
    %v1389 = vld [vmem:[%s9 + $0x188] sm:$0xf]
    %v1390 = vld [vmem:[%s9 + $0x18c] sm:$0xf]
    %v1391 = vld [vmem:[%s9 + $0x190] sm:$0xf]
    %v1392 = vld [vmem:[%s9 + $0x194] sm:$0xf]
    %v1393 = vld [vmem:[%s9 + $0x198] sm:$0xf]
    %v1394 = vld [vmem:[%s9 + $0x19c] sm:$0xf]
    %v1395 = vld [vmem:[%s9 + $0x1a0] sm:$0xf]
    %v1396 = vld [vmem:[%s9 + $0x1a4] sm:$0xf]
    %v1397 = vld [vmem:[%s9 + $0x1a8] sm:$0xf]
    %v1398 = vld [vmem:[%s9 + $0x1ac] sm:$0xf]
    %v1399 = vld [vmem:[%s9 + $0x1b0] sm:$0xf]
    %v1400 = vld [vmem:[%s9 + $0x1b4] sm:$0xf]
    %v1401 = vld [vmem:[%s9 + $0x1b8] sm:$0xf]
    %v1402 = vld [vmem:[%s9 + $0x1bc] sm:$0xf]
    %v1403 = vld [vmem:[%s9 + $0x1c0] sm:$0xf]
    %v1404 = vld [vmem:[%s9 + $0x1c4] sm:$0xf]
    %v1405 = vld [vmem:[%s9 + $0x1c8] sm:$0xf]
    %v1406 = vld [vmem:[%s9 + $0x1cc] sm:$0xf]
    %v1407 = vld [vmem:[%s9 + $0x1d0] sm:$0xf]
    %v1408 = vld [vmem:[%s9 + $0x1d4] sm:$0xf]
    %v1409 = vld [vmem:[%s9 + $0x1d8] sm:$0xf]
    %v1410 = vld [vmem:[%s9 + $0x1dc] sm:$0xf]
    %v1411 = vld [vmem:[%s9 + $0x1e0] sm:$0xf]
    %v1412 = vld [vmem:[%s9 + $0x1e4] sm:$0xf]
    %v1413 = vld [vmem:[%s9 + $0x1e8] sm:$0xf]
    %v1414 = vld [vmem:[%s9 + $0x1ec] sm:$0xf]
    %v1415 = vld [vmem:[%s9 + $0x1f0] sm:$0xf]
    %v1416 = vld [vmem:[%s9 + $0x1f4] sm:$0xf]
    %v1417 = vld [vmem:[%s9 + $0x1f8] sm:$0xf]
    %v1418 = vld [vmem:[%s9 + $0x1fc] sm:$0xf]
    %v1421 = vcombine.high %v1289, %v1289
    %v1423 = vunpack.c.l.s4 1983009808
    %v1424 = vunpack.c.0.s8 %v1423
    %v1425 = vlaneseq
    %v1426 = vshrl.u32 %v1425, 7
    %v1427 = vsub.s32 %v1424, %v1426
    %v1428 = vrot.slane %v1289, %v1427
    %v1430 = vunpack.c.l.s4 1983009808
    %v1431 = vunpack.c.0.s8 %v1430
    %v1432 = vlaneseq
    %v1433 = vshrl.u32 %v1432, 7
    %v1434 = vsub.s32 %v1431, %v1433
    %v1435 = vrot.slane %v1421, %v1434
    %v1436 = vcombine.high %v1428, %v1428
    %v1437 = vcombine.high %v1435, %v1435
    %v1438 = vcombine.high %v1290, %v1290
    %v1440 = vunpack.c.l.s4 1983009808
    %v1441 = vunpack.c.0.s8 %v1440
    %v1442 = vlaneseq
    %v1443 = vshrl.u32 %v1442, 7
    %v1444 = vsub.s32 %v1441, %v1443
    %v1445 = vrot.slane %v1290, %v1444
    %v1447 = vunpack.c.l.s4 1983009808
    %v1448 = vunpack.c.0.s8 %v1447
    %v1449 = vlaneseq
    %v1450 = vshrl.u32 %v1449, 7
    %v1451 = vsub.s32 %v1448, %v1450
    %v1452 = vrot.slane %v1438, %v1451
    %v1453 = vcombine.high %v1445, %v1445
    %v1454 = vcombine.high %v1452, %v1452
    %v1463 = vpack.c.bf16 %v1428, %v1428
    %v1464 = vpack.c.bf16 %v1436, %v1436
    %v1465 = vpack.c.bf16 %v1435, %v1435
    %v1466 = vpack.c.bf16 %v1437, %v1437
    %v1467 = vpack.c.bf16 %v1445, %v1445
    %v1468 = vpack.c.bf16 %v1453, %v1453
    %v1469 = vpack.c.bf16 %v1452, %v1452
    %v1470 = vpack.c.bf16 %v1454, %v1454
    %v1471 = vld [vmem:[%s10] sm:$0x1]
    %v1473 = vlaneseq
    %v1474 = vshrl.u32 %v1473, 7
    %v1475 = vsub.s32 0, %v1474
    %v1476 = vrot.slane %v1471, %v1475
    %v1606 = vunpack.c.l.b16 %v1291
    %v1607 = vunpack.c.l.b16 %v1292
    %v1608 = vunpack.c.l.b16 %v1293
    %v1609 = vunpack.c.l.b16 %v1294
    %v1610 = vunpack.c.l.b16 %v1295
    %v1611 = vunpack.c.l.b16 %v1296
    %v1612 = vunpack.c.l.b16 %v1297
    %v1613 = vunpack.c.l.b16 %v1298
    %v1614 = vunpack.c.l.b16 %v1299
    %v1615 = vunpack.c.l.b16 %v1300
    %v1616 = vunpack.c.l.b16 %v1301
    %v1617 = vunpack.c.l.b16 %v1302
    %v1618 = vunpack.c.l.b16 %v1303
    %v1619 = vunpack.c.l.b16 %v1304
    %v1620 = vunpack.c.l.b16 %v1305
    %v1621 = vunpack.c.l.b16 %v1306
    %v1622 = vunpack.c.l.b16 %v1307
    %v1623 = vunpack.c.l.b16 %v1308
    %v1624 = vunpack.c.l.b16 %v1309
    %v1625 = vunpack.c.l.b16 %v1310
    %v1626 = vunpack.c.l.b16 %v1311
    %v1627 = vunpack.c.l.b16 %v1312
    %v1628 = vunpack.c.l.b16 %v1313
    %v1629 = vunpack.c.l.b16 %v1314
    %v1630 = vunpack.c.l.b16 %v1315
    %v1631 = vunpack.c.l.b16 %v1316
    %v1632 = vunpack.c.l.b16 %v1317
    %v1633 = vunpack.c.l.b16 %v1318
    %v1634 = vunpack.c.l.b16 %v1319
    %v1635 = vunpack.c.l.b16 %v1320
    %v1636 = vunpack.c.l.b16 %v1321
    %v1637 = vunpack.c.l.b16 %v1322
    %v1638 = vunpack.c.l.b16 %v1323
    %v1639 = vunpack.c.l.b16 %v1324
    %v1640 = vunpack.c.l.b16 %v1325
    %v1641 = vunpack.c.l.b16 %v1326
    %v1642 = vunpack.c.l.b16 %v1327
    %v1643 = vunpack.c.l.b16 %v1328
    %v1644 = vunpack.c.l.b16 %v1329
    %v1645 = vunpack.c.l.b16 %v1330
    %v1646 = vunpack.c.l.b16 %v1331
    %v1647 = vunpack.c.l.b16 %v1332
    %v1648 = vunpack.c.l.b16 %v1333
    %v1649 = vunpack.c.l.b16 %v1334
    %v1650 = vunpack.c.l.b16 %v1335
    %v1651 = vunpack.c.l.b16 %v1336
    %v1652 = vunpack.c.l.b16 %v1337
    %v1653 = vunpack.c.l.b16 %v1338
    %v1654 = vunpack.c.l.b16 %v1339
    %v1655 = vunpack.c.l.b16 %v1340
    %v1656 = vunpack.c.l.b16 %v1341
    %v1657 = vunpack.c.l.b16 %v1342
    %v1658 = vunpack.c.l.b16 %v1343
    %v1659 = vunpack.c.l.b16 %v1344
    %v1660 = vunpack.c.l.b16 %v1345
    %v1661 = vunpack.c.l.b16 %v1346
    %v1662 = vunpack.c.l.b16 %v1347
    %v1663 = vunpack.c.l.b16 %v1348
    %v1664 = vunpack.c.l.b16 %v1349
    %v1665 = vunpack.c.l.b16 %v1350
    %v1666 = vunpack.c.l.b16 %v1351
    %v1667 = vunpack.c.l.b16 %v1352
    %v1668 = vunpack.c.l.b16 %v1353
    %v1669 = vunpack.c.l.b16 %v1354
    %v1670 = vunpack.c.l.b16 %v1355
    %v1671 = vunpack.c.l.b16 %v1356
    %v1672 = vunpack.c.l.b16 %v1357
    %v1673 = vunpack.c.l.b16 %v1358
    %v1674 = vunpack.c.l.b16 %v1359
    %v1675 = vunpack.c.l.b16 %v1360
    %v1676 = vunpack.c.l.b16 %v1361
    %v1677 = vunpack.c.l.b16 %v1362
    %v1678 = vunpack.c.l.b16 %v1363
    %v1679 = vunpack.c.l.b16 %v1364
    %v1680 = vunpack.c.l.b16 %v1365
    %v1681 = vunpack.c.l.b16 %v1366
    %v1682 = vunpack.c.l.b16 %v1367
    %v1683 = vunpack.c.l.b16 %v1368
    %v1684 = vunpack.c.l.b16 %v1369
    %v1685 = vunpack.c.l.b16 %v1370
    %v1686 = vunpack.c.l.b16 %v1371
    %v1687 = vunpack.c.l.b16 %v1372
    %v1688 = vunpack.c.l.b16 %v1373
    %v1689 = vunpack.c.l.b16 %v1374
    %v1690 = vunpack.c.l.b16 %v1375
    %v1691 = vunpack.c.l.b16 %v1376
    %v1692 = vunpack.c.l.b16 %v1377
    %v1693 = vunpack.c.l.b16 %v1378
    %v1694 = vunpack.c.l.b16 %v1379
    %v1695 = vunpack.c.l.b16 %v1380
    %v1696 = vunpack.c.l.b16 %v1381
    %v1697 = vunpack.c.l.b16 %v1382
    %v1698 = vunpack.c.l.b16 %v1383
    %v1699 = vunpack.c.l.b16 %v1384
    %v1700 = vunpack.c.l.b16 %v1385
    %v1701 = vunpack.c.l.b16 %v1386
    %v1702 = vunpack.c.l.b16 %v1387
    %v1703 = vunpack.c.l.b16 %v1388
    %v1704 = vunpack.c.l.b16 %v1389
    %v1705 = vunpack.c.l.b16 %v1390
    %v1706 = vunpack.c.l.b16 %v1391
    %v1707 = vunpack.c.l.b16 %v1392
    %v1708 = vunpack.c.l.b16 %v1393
    %v1709 = vunpack.c.l.b16 %v1394
    %v1710 = vunpack.c.l.b16 %v1395
    %v1711 = vunpack.c.l.b16 %v1396
    %v1712 = vunpack.c.l.b16 %v1397
    %v1713 = vunpack.c.l.b16 %v1398
    %v1714 = vunpack.c.l.b16 %v1399
    %v1715 = vunpack.c.l.b16 %v1400
    %v1716 = vunpack.c.l.b16 %v1401
    %v1717 = vunpack.c.l.b16 %v1402
    %v1718 = vunpack.c.l.b16 %v1403
    %v1719 = vunpack.c.l.b16 %v1404
    %v1720 = vunpack.c.l.b16 %v1405
    %v1721 = vunpack.c.l.b16 %v1406
    %v1722 = vunpack.c.l.b16 %v1407
    %v1723 = vunpack.c.l.b16 %v1408
    %v1724 = vunpack.c.l.b16 %v1409
    %v1725 = vunpack.c.l.b16 %v1410
    %v1726 = vunpack.c.l.b16 %v1411
    %v1727 = vunpack.c.l.b16 %v1412
    %v1728 = vunpack.c.l.b16 %v1413
    %v1729 = vunpack.c.l.b16 %v1414
    %v1730 = vunpack.c.l.b16 %v1415
    %v1731 = vunpack.c.l.b16 %v1416
    %v1732 = vunpack.c.l.b16 %v1417
    %v1733 = vunpack.c.l.b16 %v1418
    %v1734 = vpack.c.b16 %v1607, %v1606
    %v1735 = vpack.c.b16 %v1609, %v1608
    %v1736 = vpack.c.b16 %v1611, %v1610
    %v1737 = vpack.c.b16 %v1613, %v1612
    %v1738 = vpack.c.b16 %v1615, %v1614
    %v1739 = vpack.c.b16 %v1617, %v1616
    %v1740 = vpack.c.b16 %v1619, %v1618
    %v1741 = vpack.c.b16 %v1621, %v1620
    %v1742 = vpack.c.b16 %v1623, %v1622
    %v1743 = vpack.c.b16 %v1625, %v1624
    %v1744 = vpack.c.b16 %v1627, %v1626
    %v1745 = vpack.c.b16 %v1629, %v1628
    %v1746 = vpack.c.b16 %v1631, %v1630
    %v1747 = vpack.c.b16 %v1633, %v1632
    %v1748 = vpack.c.b16 %v1635, %v1634
    %v1749 = vpack.c.b16 %v1637, %v1636
    %v1750 = vpack.c.b16 %v1639, %v1638
    %v1751 = vpack.c.b16 %v1641, %v1640
    %v1752 = vpack.c.b16 %v1643, %v1642
    %v1753 = vpack.c.b16 %v1645, %v1644
    %v1754 = vpack.c.b16 %v1647, %v1646
    %v1755 = vpack.c.b16 %v1649, %v1648
    %v1756 = vpack.c.b16 %v1651, %v1650
    %v1757 = vpack.c.b16 %v1653, %v1652
    %v1758 = vpack.c.b16 %v1655, %v1654
    %v1759 = vpack.c.b16 %v1657, %v1656
    %v1760 = vpack.c.b16 %v1659, %v1658
    %v1761 = vpack.c.b16 %v1661, %v1660
    %v1762 = vpack.c.b16 %v1663, %v1662
    %v1763 = vpack.c.b16 %v1665, %v1664
    %v1764 = vpack.c.b16 %v1667, %v1666
    %v1765 = vpack.c.b16 %v1669, %v1668
    %v1766 = vpack.c.b16 %v1671, %v1670
    %v1767 = vpack.c.b16 %v1673, %v1672
    %v1768 = vpack.c.b16 %v1675, %v1674
    %v1769 = vpack.c.b16 %v1677, %v1676
    %v1770 = vpack.c.b16 %v1679, %v1678
    %v1771 = vpack.c.b16 %v1681, %v1680
    %v1772 = vpack.c.b16 %v1683, %v1682
    %v1773 = vpack.c.b16 %v1685, %v1684
    %v1774 = vpack.c.b16 %v1687, %v1686
    %v1775 = vpack.c.b16 %v1689, %v1688
    %v1776 = vpack.c.b16 %v1691, %v1690
    %v1777 = vpack.c.b16 %v1693, %v1692
    %v1778 = vpack.c.b16 %v1695, %v1694
    %v1779 = vpack.c.b16 %v1697, %v1696
    %v1780 = vpack.c.b16 %v1699, %v1698
    %v1781 = vpack.c.b16 %v1701, %v1700
    %v1782 = vpack.c.b16 %v1703, %v1702
    %v1783 = vpack.c.b16 %v1705, %v1704
    %v1784 = vpack.c.b16 %v1707, %v1706
    %v1785 = vpack.c.b16 %v1709, %v1708
    %v1786 = vpack.c.b16 %v1711, %v1710
    %v1787 = vpack.c.b16 %v1713, %v1712
    %v1788 = vpack.c.b16 %v1715, %v1714
    %v1789 = vpack.c.b16 %v1717, %v1716
    %v1790 = vpack.c.b16 %v1719, %v1718
    %v1791 = vpack.c.b16 %v1721, %v1720
    %v1792 = vpack.c.b16 %v1723, %v1722
    %v1793 = vpack.c.b16 %v1725, %v1724
    %v1794 = vpack.c.b16 %v1727, %v1726
    %v1795 = vpack.c.b16 %v1729, %v1728
    %v1796 = vpack.c.b16 %v1731, %v1730
    %v1797 = vpack.c.b16 %v1733, %v1732
    %1862 = vmatprep.subr.bf16.mxu0 0
    %1863 = vmatpush1.bf16.msra.mxu0 %v1734
    %1864 = vmatprep.subr.bf16.mxu0 0
    %1865 = vmatpush1.bf16.msra.mxu0 %v1735
    %1866 = vmatprep.subr.bf16.mxu0 0
    %1867 = vmatpush1.bf16.msra.mxu0 %v1736
    %1868 = vmatprep.subr.bf16.mxu0 0
    %1869 = vmatpush1.bf16.msra.mxu0 %v1737
    %1870 = vmatprep.subr.bf16.mxu0 0
    %1871 = vmatpush1.bf16.msra.mxu0 %v1738
    %1872 = vmatprep.subr.bf16.mxu0 0
    %1873 = vmatpush1.bf16.msra.mxu0 %v1739
    %1874 = vmatprep.subr.bf16.mxu0 0
    %1875 = vmatpush1.bf16.msra.mxu0 %v1740
    %1876 = vmatprep.subr.bf16.mxu0 0
    %1877 = vmatpush1.bf16.msra.mxu0 %v1741
    %1878 = vmatprep.subr.bf16.mxu0 0
    %1879 = vmatpush1.bf16.msra.mxu0 %v1742
    %1880 = vmatprep.subr.bf16.mxu0 0
    %1881 = vmatpush1.bf16.msra.mxu0 %v1743
    %1882 = vmatprep.subr.bf16.mxu0 0
    %1883 = vmatpush1.bf16.msra.mxu0 %v1744
    %1884 = vmatprep.subr.bf16.mxu0 0
    %1885 = vmatpush1.bf16.msra.mxu0 %v1745
    %1886 = vmatprep.subr.bf16.mxu0 0
    %1887 = vmatpush1.bf16.msra.mxu0 %v1746
    %1888 = vmatprep.subr.bf16.mxu0 0
    %1889 = vmatpush1.bf16.msra.mxu0 %v1747
    %1890 = vmatprep.subr.bf16.mxu0 0
    %1891 = vmatpush1.bf16.msra.mxu0 %v1748
    %1892 = vmatprep.subr.bf16.mxu0 0
    %1893 = vmatpush1.bf16.msra.mxu0 %v1749
    %1894 = vmatprep.mubr.bf16.mxu0 %v1464
    %1895 = vmatmul.mubr.bf16.gmra.mrb[0].mxu0 %v1463
    %v1896 = vpop.f32.mrb[0].mxu0
    %v1897 = vadd.f32 %v1476, %v1896
    %v1898 = vpop.f32.mrb[0].mxu0
    %v1899 = vpop.f32.mrb[0].mxu0
    %v1900 = vpop.f32.mrb[0].mxu0
    %1901 = vdwg.mxu0
    %1902 = vmatprep.subr.bf16.mxu0 0
    %1903 = vmatpush1.bf16.msra.mxu0 %v1750
    %1904 = vmatprep.subr.bf16.mxu0 0
    %1905 = vmatpush1.bf16.msra.mxu0 %v1751
    %1906 = vmatprep.subr.bf16.mxu0 0
    %1907 = vmatpush1.bf16.msra.mxu0 %v1752
    %1908 = vmatprep.subr.bf16.mxu0 0
    %1909 = vmatpush1.bf16.msra.mxu0 %v1753
    %1910 = vmatprep.subr.bf16.mxu0 0
    %1911 = vmatpush1.bf16.msra.mxu0 %v1754
    %1912 = vmatprep.subr.bf16.mxu0 0
    %1913 = vmatpush1.bf16.msra.mxu0 %v1755
    %1914 = vmatprep.subr.bf16.mxu0 0
    %1915 = vmatpush1.bf16.msra.mxu0 %v1756
    %1916 = vmatprep.subr.bf16.mxu0 0
    %1917 = vmatpush1.bf16.msra.mxu0 %v1757
    %1918 = vmatprep.subr.bf16.mxu0 0
    %1919 = vmatpush1.bf16.msra.mxu0 %v1758
    %1920 = vmatprep.subr.bf16.mxu0 0
    %1921 = vmatpush1.bf16.msra.mxu0 %v1759
    %1922 = vmatprep.subr.bf16.mxu0 0
    %1923 = vmatpush1.bf16.msra.mxu0 %v1760
    %1924 = vmatprep.subr.bf16.mxu0 0
    %1925 = vmatpush1.bf16.msra.mxu0 %v1761
    %1926 = vmatprep.subr.bf16.mxu0 0
    %1927 = vmatpush1.bf16.msra.mxu0 %v1762
    %1928 = vmatprep.subr.bf16.mxu0 0
    %1929 = vmatpush1.bf16.msra.mxu0 %v1763
    %1930 = vmatprep.subr.bf16.mxu0 0
    %1931 = vmatpush1.bf16.msra.mxu0 %v1764
    %1932 = vmatprep.subr.bf16.mxu0 0
    %1933 = vmatpush1.bf16.msra.mxu0 %v1765
    %1934 = vmatprep.mubr.bf16.mxu0 %v1466
    %1935 = vmatmul.mubr.bf16.gmra.mrb[0].mxu0 %v1465
    %v1936 = vpop.f32.mrb[0].mxu0
    %v1937 = vadd.f32 %v1897, %v1936
    %v1938 = vpop.f32.mrb[0].mxu0
    %v1939 = vpop.f32.mrb[0].mxu0
    %v1940 = vpop.f32.mrb[0].mxu0
    %1941 = vdwg.mxu0
    %1942 = vmatprep.subr.bf16.mxu0 0
    %1943 = vmatpush1.bf16.msra.mxu0 %v1766
    %1944 = vmatprep.subr.bf16.mxu0 0
    %1945 = vmatpush1.bf16.msra.mxu0 %v1767
    %1946 = vmatprep.subr.bf16.mxu0 0
    %1947 = vmatpush1.bf16.msra.mxu0 %v1768
    %1948 = vmatprep.subr.bf16.mxu0 0
    %1949 = vmatpush1.bf16.msra.mxu0 %v1769
    %1950 = vmatprep.subr.bf16.mxu0 0
    %1951 = vmatpush1.bf16.msra.mxu0 %v1770
    %1952 = vmatprep.subr.bf16.mxu0 0
    %1953 = vmatpush1.bf16.msra.mxu0 %v1771
    %1954 = vmatprep.subr.bf16.mxu0 0
    %1955 = vmatpush1.bf16.msra.mxu0 %v1772
    %1956 = vmatprep.subr.bf16.mxu0 0
    %1957 = vmatpush1.bf16.msra.mxu0 %v1773
    %1958 = vmatprep.subr.bf16.mxu0 0
    %1959 = vmatpush1.bf16.msra.mxu0 %v1774
    %1960 = vmatprep.subr.bf16.mxu0 0
    %1961 = vmatpush1.bf16.msra.mxu0 %v1775
    %1962 = vmatprep.subr.bf16.mxu0 0
    %1963 = vmatpush1.bf16.msra.mxu0 %v1776
    %1964 = vmatprep.subr.bf16.mxu0 0
    %1965 = vmatpush1.bf16.msra.mxu0 %v1777
    %1966 = vmatprep.subr.bf16.mxu0 0
    %1967 = vmatpush1.bf16.msra.mxu0 %v1778
    %1968 = vmatprep.subr.bf16.mxu0 0
    %1969 = vmatpush1.bf16.msra.mxu0 %v1779
    %1970 = vmatprep.subr.bf16.mxu0 0
    %1971 = vmatpush1.bf16.msra.mxu0 %v1780
    %1972 = vmatprep.subr.bf16.mxu0 0
    %1973 = vmatpush1.bf16.msra.mxu0 %v1781
    %1974 = vmatprep.mubr.bf16.mxu0 %v1468
    %1975 = vmatmul.mubr.bf16.gmra.mrb[0].mxu0 %v1467
    %v1976 = vpop.f32.mrb[0].mxu0
    %v1977 = vadd.f32 %v1937, %v1976
    %v1978 = vpop.f32.mrb[0].mxu0
    %v1979 = vpop.f32.mrb[0].mxu0
    %v1980 = vpop.f32.mrb[0].mxu0
    %1981 = vdwg.mxu0
    %1982 = vmatprep.subr.bf16.mxu0 0
    %1983 = vmatpush1.bf16.msra.mxu0 %v1782
    %1984 = vmatprep.subr.bf16.mxu0 0
    %1985 = vmatpush1.bf16.msra.mxu0 %v1783
    %1986 = vmatprep.subr.bf16.mxu0 0
    %1987 = vmatpush1.bf16.msra.mxu0 %v1784
    %1988 = vmatprep.subr.bf16.mxu0 0
    %1989 = vmatpush1.bf16.msra.mxu0 %v1785
    %1990 = vmatprep.subr.bf16.mxu0 0
    %1991 = vmatpush1.bf16.msra.mxu0 %v1786
    %1992 = vmatprep.subr.bf16.mxu0 0
    %1993 = vmatpush1.bf16.msra.mxu0 %v1787
    %1994 = vmatprep.subr.bf16.mxu0 0
    %1995 = vmatpush1.bf16.msra.mxu0 %v1788
    %1996 = vmatprep.subr.bf16.mxu0 0
    %1997 = vmatpush1.bf16.msra.mxu0 %v1789
    %1998 = vmatprep.subr.bf16.mxu0 0
    %1999 = vmatpush1.bf16.msra.mxu0 %v1790
    %2000 = vmatprep.subr.bf16.mxu0 0
    %2001 = vmatpush1.bf16.msra.mxu0 %v1791
    %2002 = vmatprep.subr.bf16.mxu0 0
    %2003 = vmatpush1.bf16.msra.mxu0 %v1792
    %2004 = vmatprep.subr.bf16.mxu0 0
    %2005 = vmatpush1.bf16.msra.mxu0 %v1793
    %2006 = vmatprep.subr.bf16.mxu0 0
    %2007 = vmatpush1.bf16.msra.mxu0 %v1794
    %2008 = vmatprep.subr.bf16.mxu0 0
    %2009 = vmatpush1.bf16.msra.mxu0 %v1795
    %2010 = vmatprep.subr.bf16.mxu0 0
    %2011 = vmatpush1.bf16.msra.mxu0 %v1796
    %2012 = vmatprep.subr.bf16.mxu0 0
    %2013 = vmatpush1.bf16.msra.mxu0 %v1797
    %2014 = vmatprep.mubr.bf16.mxu0 %v1470
    %2015 = vmatmul.mubr.bf16.gmra.mrb[0].mxu0 %v1469
    %v2016 = vpop.f32.mrb[0].mxu0
    %v2017 = vadd.f32 %v1977, %v2016
    %v2018 = vpop.f32.mrb[0].mxu0
    %v2019 = vpop.f32.mrb[0].mxu0
    %v2020 = vpop.f32.mrb[0].mxu0
    %2021 = vdwg.mxu0
    %v2022 = vmax.f32 %v2017, 0.0
    %v2023 = vld [vmem:[%s11] sm:$0xf]
    %v2024 = vld [vmem:[%s11 + $0x4] sm:$0xf]
    %v2025 = vld [vmem:[%s11 + $0x8] sm:$0xf]
    %v2026 = vld [vmem:[%s11 + $0xc] sm:$0xf]
    %v2027 = vpack.c.bf16 %v2022, %v2022
    %v2028 = vld [vmem:[%s12] sm:$0x1]
    %v2030 = vlaneseq
    %v2031 = vshrl.u32 %v2030, 7
    %v2032 = vsub.s32 0, %v2031
    %v2033 = vrot.slane %v2028, %v2032
    %v2039 = vunpack.c.l.b16 %v2023
    %v2040 = vunpack.c.l.b16 %v2024
    %v2041 = vunpack.c.l.b16 %v2025
    %v2042 = vunpack.c.l.b16 %v2026
    %v2043 = vpack.c.b16 %v2040, %v2039
    %v2044 = vpack.c.b16 %v2042, %v2041
    %vm2047 = vcmask 261120
    %v2049 = vsel %vm2047, %v2027, 0
    %2051 = vmatprep.subr.bf16.mxu0 0
    %2052 = vmatpush1.bf16.msra.mxu0 %v2043
    %2053 = vmatprep.subr.bf16.mxu0 0
    %2054 = vmatpush1.bf16.msra.mxu0 %v2044
    %2055 = vmatprep.subr.bf16.mxu0 0
    %2056 = vmatpush1.bf16.msra.mxu0 0
    %2057 = vmatprep.subr.bf16.mxu0 0
    %2058 = vmatpush1.bf16.msra.mxu0 0
    %2059 = vmatprep.subr.bf16.mxu0 0
    %2060 = vmatpush1.bf16.msra.mxu0 0
    %2061 = vmatprep.subr.bf16.mxu0 0
    %2062 = vmatpush1.bf16.msra.mxu0 0
    %2063 = vmatprep.subr.bf16.mxu0 0
    %2064 = vmatpush1.bf16.msra.mxu0 0
    %2065 = vmatprep.subr.bf16.mxu0 0
    %2066 = vmatpush1.bf16.msra.mxu0 0
    %2067 = vmatprep.subr.bf16.mxu0 0
    %2068 = vmatpush1.bf16.msra.mxu0 0
    %2069 = vmatprep.subr.bf16.mxu0 0
    %2070 = vmatpush1.bf16.msra.mxu0 0
    %2071 = vmatprep.subr.bf16.mxu0 0
    %2072 = vmatpush1.bf16.msra.mxu0 0
    %2073 = vmatprep.subr.bf16.mxu0 0
    %2074 = vmatpush1.bf16.msra.mxu0 0
    %2075 = vmatprep.subr.bf16.mxu0 0
    %2076 = vmatpush1.bf16.msra.mxu0 0
    %2077 = vmatprep.subr.bf16.mxu0 0
    %2078 = vmatpush1.bf16.msra.mxu0 0
    %2079 = vmatprep.subr.bf16.mxu0 0
    %2080 = vmatpush1.bf16.msra.mxu0 0
    %2081 = vmatprep.subr.bf16.mxu0 0
    %2082 = vmatpush1.bf16.msra.mxu0 0
    %2083 = vmatprep.mubr.bf16.mxu0 0
    %2084 = vmatmul.mubr.bf16.gmra.mrb[0].mxu0 %v2049
    %v2085 = vpop.f32.mrb[0].mxu0
    %v2086 = vadd.f32 %v2033, %v2085
    %v2087 = vpop.f32.mrb[0].mxu0
    %v2088 = vpop.f32.mrb[0].mxu0
    %v2089 = vpop.f32.mrb[0].mxu0
    %2090 = vdwg.mxu0
    %vm2091 = vcmask 74752
    %v2092 = vsel %vm2091, %v2086, -inf
    %2093 = vmax.xlane.f32.xlu0 %v2092
    %v2094 = vpop.xlane.xlu0 %2093
    %v2095 = vsub.f32 %v2086, %v2094
    %v2096 = vmul.f32 %v2095, 1.442695
    %v2097 = vpow.pop %v2096
    %v2098 = vsel %vm2091, %v2097, 0.0
    %2099 = vadd.xlane.f32.xlu0 %v2098
    %v2100 = vpop.xlane.xlu0 %2099
    %v2101 = vlog2.pop %v2100
    %v2102 = vmul.f32 %v2101, 0.6931472
    %v2103 = vsub.f32 %v2095, %v2102
    %2104 = vst.msk [vmem:[#allocation12] sm:$0x3] %vm2091, %v2103
    // Predicated region
    $region70: #{a_call__.1} parent=1 // pred_check
      _
    $region71: #{a_call__.1} parent=1 // pred_check_branch
      %2106 = sbr.rel (0) target = $region73
    $region72: #{a_call__.1} parent=1 // pred_region
      %s2108 = ssub.s32 32, 32
      %2109 = vsyncadd [#allocation6], %s2108
      %s2111 = sshll.u32 [#allocation12], 4
      %s2112 = int_to_ptr.vmem [resolvable:$true] %s2111
      %2114 = dma.vmem_to_hbm [thread:$0]  %s2112, 32, %s13, [#allocation6]
    $region73: #{a_call__.1} parent=1 // pred_fallthru
      _
    // Predicated region
    $region74: #{a_call__.1} parent=1 // pred_check
      _
    $region75: #{a_call__.1} parent=1 // pred_check_branch
      %2116 = sbr.rel (0) target = $region77
    $region76: #{a_call__.1} parent=1 // pred_region
      %2117 = dma.done [#allocation6], 32
    $region77: #{a_call__.1} parent=1 // pred_fallthru
      _
    %2118 = vsyncpa [#allocation5], 1
    %2119 = vsyncpa [#allocation8], 1
    %2120 = vsyncpa [#allocation11], 1
    %2121 = vsyncpa [#allocation6], 1

</llo_original>
